<compile_context>
chip_gen: v7x
topology: tpu7x:2x2x1
jax: 0.10.0
libtpu: 0.0.40
codegen_flags: <defaults>
</compile_context>

<pallas_src>
import functools

import jax
import jax.numpy as jnp
from jax.experimental import pallas as pl
from jax.experimental.pallas import tpu as pltpu

MID = 64  # planes[1] == planes[2] == planes[3] == 64


# --------------------------------------------------------------------------- #
# Kernel
# --------------------------------------------------------------------------- #
def scr_kernel(x_ref, w1_ref, w3_ref, w5_ref, b_ref, o_ref, z_ref):
    # x_ref : (1, C, UV*TP)      input tile (lane order: k-major, pixel-minor)
    # w1_ref: (MID, C)           conv1x1_in weight with BN1 scale folded in
    # w3_ref: (MID, UV*MID)      conv3d weight, flattened, BN3 scale folded in
    # w5_ref: (C, MID)           conv1x1_out weight with BN5 scale folded in
    # b_ref : (2*MID + C, 1) f32 packed BN shifts [t1; t3; t5]
    # o_ref : (C, TP)            output tile
    # z_ref : (UV*MID, TP)       VMEM scratch: packed post-ReLU stage-1 activations
    mid = w1_ref.shape[0]
    c_out = o_ref.shape[0]
    tp = o_ref.shape[1]
    uv = x_ref.shape[2] // tp

    b1 = b_ref[0:mid, :]                       # (MID, 1)
    b3 = b_ref[mid:2 * mid, :]                 # (MID, 1)
    b5 = b_ref[2 * mid:2 * mid + c_out, :]     # (C, 1)

    # Stage 1: conv1x1_in (+ folded BN1) + ReLU as a single (MID, C)@(C, UV*TP)
    # matmul — one (hoisted) bias broadcast, one ReLU, no per-k matmul boundaries.
    z1 = jnp.dot(w1_ref[...], x_ref[0], preferred_element_type=jnp.float32)
    z1 = jnp.maximum(z1 + b1, 0.0).astype(z_ref.dtype)        # (MID, UV*TP)

    # Repack: 128-aligned lane slices -> sublane slabs so stage 2 stays a single
    # big-K matmul (K = UV*MID = 576 keeps MXU depth utilization high).
    for k in range(uv):
        z_ref[k * mid:(k + 1) * mid, :] = z1[:, k * tp:(k + 1) * tp]

    # Stage 2: Conv3d kernel (1,u,v) == one (MID, UV*MID)@(UV*MID, TP) matmul
    # (+ folded BN3) + ReLU.
    y = jnp.dot(w3_ref[...], z_ref[...], preferred_element_type=jnp.float32)
    y = jnp.maximum(y + b3, 0.0).astype(w5_ref.dtype)

    # Stage 3: conv1x1_out (+ folded BN5, no ReLU).
    out = jnp.dot(w5_ref[...], y, preferred_element_type=jnp.float32)
    o_ref[...] = (out + b5).astype(o_ref.dtype)


# --------------------------------------------------------------------------- #
# Tile selection + host layout (single fused transpose, no padding)
# --------------------------------------------------------------------------- #
def _divisors(n):
    return [d for d in range(1, n + 1) if n % d == 0]


def _pixel_tile_candidates(b, h, w):
    # Tile sizes that align with the (b, h, w) nesting so the host-side
    # re-layout is ONE transpose (free reshapes on both sides, no padding).
    cands = {}
    for d in _divisors(w):
        cands[d] = ('w', d, b * h * (w // d))
    for d in _divisors(h):
        cands[d * w] = ('h', d, b * (h // d))
    for d in _divisors(b):
        cands[d * h * w] = ('b', d, b // d)
    return [(tp, kind, d, nt) for tp, (kind, d, nt) in cands.items()]


def _vmem_bytes(tp, c, uv, itemsize):
    per_pixel = (2 * c * uv * itemsize      # x tile, double-buffered
                 + MID * uv * 4             # stage-1 f32 matmul output
                 + 2 * MID * uv * itemsize  # stage-1 cast + z scratch
                 + MID * (4 + itemsize)     # stage-2 output
                 + 2 * c * 4)               # out tile (f32), double-buffered
    weights = 2 * ((MID * c + MID * uv * MID + c * MID) * itemsize
                   + (2 * MID + c) * 128 * 4)
    return tp * per_pixel + weights + (1 << 20)   # + slack


def _choose_tile(b, c, h, w, uv, compute_dtype, target_tp, vmem_budget):
    P = b * h * w
    isz = jnp.dtype(compute_dtype).itemsize
    best = None
    for tp, kind, d, nt in _pixel_tile_candidates(b, h, w):
        if _vmem_bytes(tp, c, uv, isz) > vmem_budget:
            continue
        if tp % 128 != 0 and tp != P:
            continue  # keep block last dims 128-aligned (or full) for clean layout
        # prefer: >=2 grid steps (v7x dual TC), tp within target, even step count,
        # then the largest tile (amortize ~0.35us/step overhead).
        key = (nt >= 2, tp <= target_tp, nt % 2 == 0, tp)
        if best is None or key > best[0]:
            best = (key, tp, kind, d, nt)
    if best is None:
        # TODO(synk): generic flat-pixel tiling with padding for shapes whose
        # pixel dims admit no 128-aligned structured split that fits VMEM.
        raise NotImplementedError("no VMEM-feasible 128-aligned pixel tiling")
    _, tp, kind, d, nt = best
    return tp, kind, d, nt


def _build_xk(x, kind, d, compute_dtype):
    """Return x laid out as (num_tiles, C, UV*TP) in one transpose pass."""
    b, c, h, w, u, v = x.shape
    uv = u * v
    if kind == 'w':
        xr = x.reshape(b, c, h, w // d, d, u, v)
        xt = jnp.transpose(xr, (0, 2, 3, 1, 5, 6, 4))   # (b, h, wo, c, u, v, wi)
        nt, tp = b * h * (w // d), d
    elif kind == 'h':
        xr = x.reshape(b, c, h // d, d, w, u, v)
        xt = jnp.transpose(xr, (0, 2, 1, 5, 6, 3, 4))   # (b, ho, c, u, v, hi, w)
        nt, tp = b * (h // d), d * w
    else:  # 'b'
        xr = x.reshape(b // d, d, c, h, w, u, v)
        xt = jnp.transpose(xr, (0, 2, 5, 6, 1, 3, 4))   # (bo, c, u, v, bi, h, w)
        nt, tp = b // d, d * h * w
    return xt.reshape(nt, c, uv * tp).astype(compute_dtype), nt, tp


# --------------------------------------------------------------------------- #
# Wrapper
# --------------------------------------------------------------------------- #
@functools.partial(jax.jit, static_argnames=("tp", "compute_dtype"))
def scr_forward(x, kparams, *, tp=4096, compute_dtype=jnp.bfloat16):
    """x: (b, c, h, w, u, v) float32 -> (b, c, h, w), matching SCR.forward (eval-mode BN)."""
    b, c, h, w, u, v = x.shape
    P, UV = b * h * w, u * v
    w1s, w3f, w5s, bias = kparams

    # Conservative budget fits v7x's 64 MiB physical VMEM with double-buffering.
    vmem_budget = 24 * (1 << 20)
    tp_eff, kind, d, _ = _choose_tile(b, c, h, w, UV, compute_dtype, tp, vmem_budget)
    xk, nt, tp_eff = _build_xk(x, kind, d, compute_dtype)

    est = _vmem_bytes(tp_eff, c, UV, jnp.dtype(compute_dtype).itemsize)
    vmem_limit = int(min(48 * (1 << 20), max(3 * est // 2, 24 * (1 << 20))))

    out = pl.pallas_call(
        scr_kernel,
        out_shape=jax.ShapeDtypeStruct((c, P), jnp.float32),
        grid_spec=pltpu.PrefetchScalarGridSpec(
            num_scalar_prefetch=0,
            grid=(nt,),
            in_specs=[
                pl.BlockSpec((1, c, UV * tp_eff), lambda i: (i, 0, 0)),  # x tile
                pl.BlockSpec((MID, c), lambda i: (0, 0)),                # W1 (BN1 folded)
                pl.BlockSpec((MID, UV * MID), lambda i: (0, 0)),         # W3 flat (BN3 folded)
                pl.BlockSpec((c, MID), lambda i: (0, 0)),                # W5 (BN5 folded)
                pl.BlockSpec((2 * MID + c, 1), lambda i: (0, 0)),        # packed BN shifts (f32)
            ],
            out_specs=pl.BlockSpec((c, tp_eff), lambda i: (0, i)),
            scratch_shapes=[pltpu.VMEM((UV * MID, tp_eff), compute_dtype)],
        ),
        compiler_params=pltpu.CompilerParams(
            dimension_semantics=("parallel",),
            vmem_limit_bytes=vmem_limit,
        ),
    )(xk,
      w1s.astype(compute_dtype),
      w3f.astype(compute_dtype),
      w5s.astype(compute_dtype),
      bias)

    # back to PyTorch output layout (b, channel, h, w)
    return jnp.transpose(out.reshape(c, b, h, w), (1, 0, 2, 3))


# --------------------------------------------------------------------------- #
# Parameters + pure-JAX reference
# --------------------------------------------------------------------------- #
def init_params(key, channel, ksize=3, eps=1e-5):
    ks = jax.random.split(key, 15)
    w1 = jax.random.normal(ks[0], (MID, channel), jnp.float32) * 0.1                # Conv2d 1x1 in
    w3 = jax.random.normal(ks[1], (MID, MID, 1, ksize, ksize), jnp.float32) * 0.05  # Conv3d
    w5 = jax.random.normal(ks[2], (channel, MID), jnp.float32) * 0.1                # Conv2d 1x1 out

    def bn(kg, kb, km, kv, n):
        gamma = 0.5 + jax.random.uniform(kg, (n,), jnp.float32)
        beta = jax.random.normal(kb, (n,), jnp.float32) * 0.1
        mean = jax.random.normal(km, (n,), jnp.float32) * 0.1
        var = 0.5 + jax.random.uniform(kv, (n,), jnp.float32)
        scale = gamma / jnp.sqrt(var + eps)
        shift = beta - mean * scale
        return scale, shift

    s1, t1 = bn(ks[3], ks[4], ks[5], ks[6], MID)
    s3, t3 = bn(ks[7], ks[8], ks[9], ks[10], MID)
    s5, t5 = bn(ks[11], ks[12], ks[13], ks[14], channel)

    raw = (w1, w3, w5, (s1, t1), (s3, t3), (s5, t5))

    # kernel-ready params: BN scales folded into the conv weights (f32 masters)
    w1s = w1 * s1[:, None]                                                    # (MID, C)
    w3f = w3[:, :, 0] * s3[:, None, None, None]                               # (O, I, u, v)
    w3f = jnp.transpose(w3f, (0, 2, 3, 1)).reshape(MID, ksize * ksize * MID)  # (MID, UV*MID)
    w5s = w5 * s5[:, None]                                                    # (C, MID)
    bias = jnp.concatenate([t1, t3, t5]).reshape(-1, 1)                       # (2*MID + C, 1)
    return raw, (w1s, w3f, w5s, bias)


def ref_forward(x, raw):
    """Pure-JAX reference mirroring the PyTorch forward (eval-mode BN)."""
    w1, w3, w5, (s1, t1), (s3, t3), (s5, t5) = raw
    b, c, h, w_, u, v = x.shape
    x2 = x.reshape(b, c, h * w_, u * v)
    z = jnp.einsum('oc,bcpq->bopq', w1, x2)
    z = jnp.maximum(z * s1[None, :, None, None] + t1[None, :, None, None], 0.0)
    z = z.reshape(b, MID, h * w_, u, v)
    y = jnp.einsum('ocij,bcdij->bod', w3[:, :, 0], z)
    y = jnp.maximum(y * s3[None, :, None] + t3[None, :, None], 0.0)
    y = y.reshape(b, MID, h, w_)
    o = jnp.einsum('oc,bchw->bohw', w5, y)
    return o * s5[None, :, None, None] + t5[None, :, None, None]


if __name__ == "__main__":
    key = jax.random.PRNGKey(0)
    kx, kp = jax.random.split(key)

    # u=v=ksize=3 as SCR's view() requires; P = b*h*w = 512 pixels
    b, channel, h, w, u, v = 2, 16, 16, 16, 3, 3
    x = jax.random.normal(kx, (b, channel, h, w, u, v), jnp.float32)

    raw, kparams = init_params(kp, channel, ksize=3)
    ref = ref_forward(x, raw)

    # f32 path (tight check); tile selection picks TP=256 -> 2 "parallel" grid
    # steps, so both v7x TensorCores get work.
    out_f32 = jax.block_until_ready(scr_forward(x, kparams, compute_dtype=jnp.float32))
    assert out_f32.shape == (b, channel, h, w)
    assert jnp.allclose(out_f32, ref, atol=1e-3, rtol=1e-3), "f32 mismatch vs reference"

    # bf16 inputs/weights with f32 accumulation (production path on v5e/v6e/v7x)
    out_bf16 = jax.block_until_ready(scr_forward(x, kparams, compute_dtype=jnp.bfloat16))
    assert out_bf16.shape == (b, channel, h, w)
    assert jnp.allclose(out_bf16, ref, atol=5e-2, rtol=5e-2), "bf16 mismatch vs reference"

    print("KERNEL_OK")
</pallas_src>

<mosaic_0001>
module attributes {stable_mosaic.version = 11 : i64} {
  func.func @scr_kernel(%arg0: i32, %arg1: memref<1x16x2304xf32, #tpu.memory_space<vmem>>, %arg2: memref<64x16xf32, #tpu.memory_space<vmem>>, %arg3: memref<64x576xf32, #tpu.memory_space<vmem>>, %arg4: memref<16x64xf32, #tpu.memory_space<vmem>>, %arg5: memref<144x1xf32, #tpu.memory_space<vmem>>, %arg6: memref<16x256xf32, #tpu.memory_space<vmem>>, %arg7: memref<576x256xf32, #tpu.memory_space<vmem>>) attributes {dimension_semantics = [#tpu.dimension_semantics<parallel>], iteration_bounds = array<i64: 2>, scalar_prefetch = 0 : i64, scratch_operands = 1 : i64, tpu.core_type = #tpu.core_type<tc>, window_params = [{transform_indices = @transform_0, window_bounds = array<i64: 1, 16, 2304>}, {pipeline_mode = #tpu.pipeline_mode<synchronous>, transform_indices = @transform_1, window_bounds = array<i64: 64, 16>}, {pipeline_mode = #tpu.pipeline_mode<synchronous>, transform_indices = @transform_2, window_bounds = array<i64: 64, 576>}, {pipeline_mode = #tpu.pipeline_mode<synchronous>, transform_indices = @transform_3, window_bounds = array<i64: 16, 64>}, {pipeline_mode = #tpu.pipeline_mode<synchronous>, transform_indices = @transform_4, window_bounds = array<i64: 144, 1>}, {transform_indices = @transform_5, window_bounds = array<i64: 16, 256>}]} {
    %c0 = arith.constant 0 : index
    %c0_0 = arith.constant 0 : index
    %0 = vector.load %arg5[%c0, %c0_0] : memref<144x1xf32, #tpu.memory_space<vmem>>, vector<64x1xf32>
    %c64 = arith.constant 64 : index
    %c0_1 = arith.constant 0 : index
    %1 = vector.load %arg5[%c64, %c0_1] : memref<144x1xf32, #tpu.memory_space<vmem>>, vector<64x1xf32>
    %c128 = arith.constant 128 : index
    %c0_2 = arith.constant 0 : index
    %2 = vector.load %arg5[%c128, %c0_2] : memref<144x1xf32, #tpu.memory_space<vmem>>, vector<16x1xf32>
    %c0_3 = arith.constant 0 : index
    %c0_4 = arith.constant 0 : index
    %3 = vector.load %arg2[%c0_3, %c0_4] : memref<64x16xf32, #tpu.memory_space<vmem>>, vector<64x16xf32>
    %c0_5 = arith.constant 0 : index
    %c0_6 = arith.constant 0 : index
    %c0_7 = arith.constant 0 : index
    %4 = vector.load %arg1[%c0_5, %c0_6, %c0_7] : memref<1x16x2304xf32, #tpu.memory_space<vmem>>, vector<1x16x2304xf32>
    %5 = vector.shape_cast %4 : vector<1x16x2304xf32> to vector<16x2304xf32>
    %cst = arith.constant dense<0.000000e+00> : vector<64x2304xf32>
    %6 = tpu.matmul %3, %5, %cst {dimension_numbers = #tpu.dot_dimension_numbers<[1], [0], [0], [1], [0, 0, 1, 1], [], []>} : vector<64x16xf32>, vector<16x2304xf32>, vector<64x2304xf32> -> vector<64x2304xf32>
    %7 = vector.broadcast %0 : vector<64x1xf32> to vector<64x2304xf32>
    %8 = arith.addf %6, %7 : vector<64x2304xf32>
    %cst_8 = arith.constant 0.000000e+00 : f32
    %9 = vector.broadcast %cst_8 : f32 to vector<64x2304xf32>
    %10 = arith.maximumf %8, %9 : vector<64x2304xf32>
    %11 = vector.extract_strided_slice %10 {offsets = [0, 0], sizes = [64, 256], strides = [1, 1]} : vector<64x2304xf32> to vector<64x256xf32>
    %c0_9 = arith.constant 0 : index
    %c0_10 = arith.constant 0 : index
    %12 = vector.load %arg7[%c0_9, %c0_10] : memref<576x256xf32, #tpu.memory_space<vmem>>, vector<64x256xf32>
    tpu.vector_store %arg7[%c0_9, %c0_10], %11 {strides = array<i32>} : memref<576x256xf32, #tpu.memory_space<vmem>>, vector<64x256xf32>,
    %13 = vector.extract_strided_slice %10 {offsets = [0, 256], sizes = [64, 256], strides = [1, 1]} : vector<64x2304xf32> to vector<64x256xf32>
    %c64_11 = arith.constant 64 : index
    %c0_12 = arith.constant 0 : index
    %14 = vector.load %arg7[%c64_11, %c0_12] : memref<576x256xf32, #tpu.memory_space<vmem>>, vector<64x256xf32>
    tpu.vector_store %arg7[%c64_11, %c0_12], %13 {strides = array<i32>} : memref<576x256xf32, #tpu.memory_space<vmem>>, vector<64x256xf32>,
    %15 = vector.extract_strided_slice %10 {offsets = [0, 512], sizes = [64, 256], strides = [1, 1]} : vector<64x2304xf32> to vector<64x256xf32>
    %c128_13 = arith.constant 128 : index
    %c0_14 = arith.constant 0 : index
    %16 = vector.load %arg7[%c128_13, %c0_14] : memref<576x256xf32, #tpu.memory_space<vmem>>, vector<64x256xf32>
    tpu.vector_store %arg7[%c128_13, %c0_14], %15 {strides = array<i32>} : memref<576x256xf32, #tpu.memory_space<vmem>>, vector<64x256xf32>,
    %17 = vector.extract_strided_slice %10 {offsets = [0, 768], sizes = [64, 256], strides = [1, 1]} : vector<64x2304xf32> to vector<64x256xf32>
    %c192 = arith.constant 192 : index
    %c0_15 = arith.constant 0 : index
    %18 = vector.load %arg7[%c192, %c0_15] : memref<576x256xf32, #tpu.memory_space<vmem>>, vector<64x256xf32>
    tpu.vector_store %arg7[%c192, %c0_15], %17 {strides = array<i32>} : memref<576x256xf32, #tpu.memory_space<vmem>>, vector<64x256xf32>,
    %19 = vector.extract_strided_slice %10 {offsets = [0, 1024], sizes = [64, 256], strides = [1, 1]} : vector<64x2304xf32> to vector<64x256xf32>
    %c256 = arith.constant 256 : index
    %c0_16 = arith.constant 0 : index
    %20 = vector.load %arg7[%c256, %c0_16] : memref<576x256xf32, #tpu.memory_space<vmem>>, vector<64x256xf32>
    tpu.vector_store %arg7[%c256, %c0_16], %19 {strides = array<i32>} : memref<576x256xf32, #tpu.memory_space<vmem>>, vector<64x256xf32>,
    %21 = vector.extract_strided_slice %10 {offsets = [0, 1280], sizes = [64, 256], strides = [1, 1]} : vector<64x2304xf32> to vector<64x256xf32>
    %c320 = arith.constant 320 : index
    %c0_17 = arith.constant 0 : index
    %22 = vector.load %arg7[%c320, %c0_17] : memref<576x256xf32, #tpu.memory_space<vmem>>, vector<64x256xf32>
    tpu.vector_store %arg7[%c320, %c0_17], %21 {strides = array<i32>} : memref<576x256xf32, #tpu.memory_space<vmem>>, vector<64x256xf32>,
    %23 = vector.extract_strided_slice %10 {offsets = [0, 1536], sizes = [64, 256], strides = [1, 1]} : vector<64x2304xf32> to vector<64x256xf32>
    %c384 = arith.constant 384 : index
    %c0_18 = arith.constant 0 : index
    %24 = vector.load %arg7[%c384, %c0_18] : memref<576x256xf32, #tpu.memory_space<vmem>>, vector<64x256xf32>
    tpu.vector_store %arg7[%c384, %c0_18], %23 {strides = array<i32>} : memref<576x256xf32, #tpu.memory_space<vmem>>, vector<64x256xf32>,
    %25 = vector.extract_strided_slice %10 {offsets = [0, 1792], sizes = [64, 256], strides = [1, 1]} : vector<64x2304xf32> to vector<64x256xf32>
    %c448 = arith.constant 448 : index
    %c0_19 = arith.constant 0 : index
    %26 = vector.load %arg7[%c448, %c0_19] : memref<576x256xf32, #tpu.memory_space<vmem>>, vector<64x256xf32>
    tpu.vector_store %arg7[%c448, %c0_19], %25 {strides = array<i32>} : memref<576x256xf32, #tpu.memory_space<vmem>>, vector<64x256xf32>,
    %27 = vector.extract_strided_slice %10 {offsets = [0, 2048], sizes = [64, 256], strides = [1, 1]} : vector<64x2304xf32> to vector<64x256xf32>
    %c512 = arith.constant 512 : index
    %c0_20 = arith.constant 0 : index
    %28 = vector.load %arg7[%c512, %c0_20] : memref<576x256xf32, #tpu.memory_space<vmem>>, vector<64x256xf32>
    tpu.vector_store %arg7[%c512, %c0_20], %27 {strides = array<i32>} : memref<576x256xf32, #tpu.memory_space<vmem>>, vector<64x256xf32>,
    %c0_21 = arith.constant 0 : index
    %c0_22 = arith.constant 0 : index
    %29 = vector.load %arg3[%c0_21, %c0_22] : memref<64x576xf32, #tpu.memory_space<vmem>>, vector<64x576xf32>
    %c0_23 = arith.constant 0 : index
    %c0_24 = arith.constant 0 : index
    %30 = vector.load %arg7[%c0_23, %c0_24] : memref<576x256xf32, #tpu.memory_space<vmem>>, vector<576x256xf32>
    %cst_25 = arith.constant dense<0.000000e+00> : vector<64x256xf32>
    %31 = tpu.matmul %29, %30, %cst_25 {dimension_numbers = #tpu.dot_dimension_numbers<[1], [0], [0], [1], [0, 0, 1, 1], [], []>} : vector<64x576xf32>, vector<576x256xf32>, vector<64x256xf32> -> vector<64x256xf32>
    %32 = vector.broadcast %1 : vector<64x1xf32> to vector<64x256xf32>
    %33 = arith.addf %31, %32 : vector<64x256xf32>
    %cst_26 = arith.constant 0.000000e+00 : f32
    %34 = vector.broadcast %cst_26 : f32 to vector<64x256xf32>
    %35 = arith.maximumf %33, %34 : vector<64x256xf32>
    %c0_27 = arith.constant 0 : index
    %c0_28 = arith.constant 0 : index
    %36 = vector.load %arg4[%c0_27, %c0_28] : memref<16x64xf32, #tpu.memory_space<vmem>>, vector<16x64xf32>
    %cst_29 = arith.constant dense<0.000000e+00> : vector<16x256xf32>
    %37 = tpu.matmul %36, %35, %cst_29 {dimension_numbers = #tpu.dot_dimension_numbers<[1], [0], [0], [1], [0, 0, 1, 1], [], []>} : vector<16x64xf32>, vector<64x256xf32>, vector<16x256xf32> -> vector<16x256xf32>
    %38 = vector.broadcast %2 : vector<16x1xf32> to vector<16x256xf32>
    %39 = arith.addf %37, %38 : vector<16x256xf32>
    %c0_30 = arith.constant 0 : index
    %c0_31 = arith.constant 0 : index
    %40 = vector.load %arg6[%c0_30, %c0_31] : memref<16x256xf32, #tpu.memory_space<vmem>>, vector<16x256xf32>
    tpu.vector_store %arg6[%c0_30, %c0_31], %39 {strides = array<i32>} : memref<16x256xf32, #tpu.memory_space<vmem>>, vector<16x256xf32>,
    return
  }
  func.func @transform_0(%arg0: i32) -> (i32, i32, i32) {
    %c0_i32 = arith.constant 0 : i32
    %c0_i32_0 = arith.constant 0 : i32
    %c0_i32_1 = arith.constant 0 : i32
    return %arg0, %c0_i32, %c0_i32_0 : i32, i32, i32
  }
  func.func @transform_1(%arg0: i32) -> (i32, i32) {
    %c0_i32 = arith.constant 0 : i32
    %c0_i32_0 = arith.constant 0 : i32
    %c0_i32_1 = arith.constant 0 : i32
    return %c0_i32, %c0_i32_0 : i32, i32
  }
  func.func @transform_2(%arg0: i32) -> (i32, i32) {
    %c0_i32 = arith.constant 0 : i32
    %c0_i32_0 = arith.constant 0 : i32
    %c0_i32_1 = arith.constant 0 : i32
    return %c0_i32, %c0_i32_0 : i32, i32
  }
  func.func @transform_3(%arg0: i32) -> (i32, i32) {
    %c0_i32 = arith.constant 0 : i32
    %c0_i32_0 = arith.constant 0 : i32
    %c0_i32_1 = arith.constant 0 : i32
    return %c0_i32, %c0_i32_0 : i32, i32
  }
  func.func @transform_4(%arg0: i32) -> (i32, i32) {
    %c0_i32 = arith.constant 0 : i32
    %c0_i32_0 = arith.constant 0 : i32
    %c0_i32_1 = arith.constant 0 : i32
    return %c0_i32, %c0_i32_0 : i32, i32
  }
  func.func @transform_5(%arg0: i32) -> (i32, i32) {
    %c0_i32 = arith.constant 0 : i32
    %c0_i32_0 = arith.constant 0 : i32
    return %c0_i32, %arg0 : i32, i32
  }
}

</mosaic_0001>

<llo_original>
// kernel: scr_forward.1
$region0: #{scr_forward.1}
  #allocation0 [shape = 'u32[]', space=smem, size = 0x4, offset = 0x4, fixed_abs, tag = 'smem constant byte address 0x4 - core index']
  #allocation1 [shape = 'u32[144,128]{1,0:T(1,128)}', space=vmem, size = 0x12000, scoped, tag = 'internal scratch']
  #allocation2 [shape = 'f32[576,256]{1,0:T(8,128)}', space=vmem, size = 0x90000, scoped, tag = 'scratch operand']
  %s0 = inlined_call_operand.vmem [shape: f32[2,16,2304], index: 0, kind: input, shape index: {}]
  %s1 = inlined_call_operand.vmem [shape: f32[64,16], index: 1, kind: input, shape index: {}]
  %s2 = inlined_call_operand.vmem [shape: f32[64,576], index: 2, kind: input, shape index: {}]
  %s3 = inlined_call_operand.vmem [shape: f32[16,64], index: 3, kind: input, shape index: {}]
  %s4 = inlined_call_operand.vmem [shape: f32[144,1], index: 4, kind: input, shape index: {}]
  %s5 = inlined_call_operand.vmem [shape: f32[16,512], index: 5, kind: output, shape index: {}]
  %s6 = sld [smem:[#allocation0]]
  $region72: #{scr_forward.1} parent=0
    _
  %s8 = ssub.s32 1, %s6
  %s9 = scalar_select 0, %s8, %s6
  $region1: #{scr_forward.1} parent=0
    #allocation3 [shape = 'u8[32768]{0}', space=vmem, size = 0x8000, scoped, tag = 'output window, operand 0']
    loop: start=0, step=1, limit=4
    $region2: #{scr_forward.1} parent=1 // loop_pre_header
      _
    $region3: #{scr_forward.1} parent=1 // loop_header
      %s11 = sphi 0, %s15
      %p12 = scmp.ge.s32.totalorder %s11, 4
      %s21 = sphi 0, %s23
      %s24 = sphi 0, %s21
      %s25 = sphi 0, %s24
      %s41 = sphi 0, %s25
      %s45 = sphi 0, %s45
      %s47 = sphi 0, %s45
      %s48 = sphi 0, %s47
      %s62 = sphi 0, %s48
      %s66 = sphi 0, %s66
      %s68 = sphi 0, %s66
      %s69 = sphi 0, %s68
      %s83 = sphi 0, %s69
      %s87 = sphi 0, %s87
      %s89 = sphi 0, %s87
      %s90 = sphi 0, %s89
      %s104 = sphi 0, %s90
      %s108 = sphi 0, %s108
      %s110 = sphi 0, %s108
      %s111 = sphi 0, %s110
      %s125 = sphi 0, %s111
      %s131 = sphi 0, %s133
      %s134 = sphi 0, %s131
      %s135 = sphi 0, %s134
      %s151 = sphi 0, %s135
    $region4: #{scr_forward.1} parent=1 // loop_header_branch
      %14 = sbr.rel (%p12) target = $region8
    $region5: #{scr_forward.1} parent=1 // loop_body
      %s16 = ssub.s32 %s11, 1
      %s17 = ssub.s32 %s11, 2
      %s18 = sadd.s32 %s11, 1
      %s19 = ssub.s32 %s11, %s18
      %p20 = scmp.eq.s32.totalorder %s19, 0
      %s22 = sadd.s32 %s21, 1
      %s23 = scalar_select %p20, %s21, %s22
      %p26 = pneg %p20
      %p27 = scmp.eq.s32.totalorder %s11, 1
      %p28 = por %p26, %p27
      %p29 = scmp.ne.s32.totalorder %s21, %s24
      %p30 = scmp.eq.s32.totalorder %s11, 0
      %p31 = por %p29, %p30
      %p32 = scmp.ne.s32.totalorder %s21, %s24
      %p33 = scmp.eq.s32.totalorder %s16, 1
      %p34 = por %p32, %p33
      %p35 = scmp.ne.s32.totalorder %s24, %s25
      %p36 = scmp.eq.s32.totalorder %s16, 0
      %p37 = por %p35, %p36
      %p38 = scmp.ne.s32.totalorder %s24, %s25
      %p39 = scmp.eq.s32.totalorder %s17, 1
      %p40 = por %p38, %p39
      %p42 = scmp.ne.s32.totalorder %s25, %s41
      %p43 = scmp.eq.s32.totalorder %s17, 0
      %p44 = por %p42, %p43
      %s46 = sadd.s32 %s45, 1
      %p49 = scmp.eq.s32.totalorder %s11, 1
      %p50 = scmp.ne.s32.totalorder %s45, %s47
      %p51 = scmp.eq.s32.totalorder %s11, 0
      %p52 = por %p50, %p51
      %p53 = scmp.ne.s32.totalorder %s45, %s47
      %p54 = scmp.eq.s32.totalorder %s16, 1
      %p55 = por %p53, %p54
      %p56 = scmp.ne.s32.totalorder %s47, %s48
      %p57 = scmp.eq.s32.totalorder %s16, 0
      %p58 = por %p56, %p57
      %p59 = scmp.ne.s32.totalorder %s47, %s48
      %p60 = scmp.eq.s32.totalorder %s17, 1
      %p61 = por %p59, %p60
      %p63 = scmp.ne.s32.totalorder %s48, %s62
      %p64 = scmp.eq.s32.totalorder %s17, 0
      %p65 = por %p63, %p64
      %s67 = sadd.s32 %s66, 1
      %p70 = scmp.eq.s32.totalorder %s11, 1
      %p71 = scmp.ne.s32.totalorder %s66, %s68
      %p72 = scmp.eq.s32.totalorder %s11, 0
      %p73 = por %p71, %p72
      %p74 = scmp.ne.s32.totalorder %s66, %s68
      %p75 = scmp.eq.s32.totalorder %s16, 1
      %p76 = por %p74, %p75
      %p77 = scmp.ne.s32.totalorder %s68, %s69
      %p78 = scmp.eq.s32.totalorder %s16, 0
      %p79 = por %p77, %p78
      %p80 = scmp.ne.s32.totalorder %s68, %s69
      %p81 = scmp.eq.s32.totalorder %s17, 1
      %p82 = por %p80, %p81
      %p84 = scmp.ne.s32.totalorder %s69, %s83
      %p85 = scmp.eq.s32.totalorder %s17, 0
      %p86 = por %p84, %p85
      %s88 = sadd.s32 %s87, 1
      %p91 = scmp.eq.s32.totalorder %s11, 1
      %p92 = scmp.ne.s32.totalorder %s87, %s89
      %p93 = scmp.eq.s32.totalorder %s11, 0
      %p94 = por %p92, %p93
      %p95 = scmp.ne.s32.totalorder %s87, %s89
      %p96 = scmp.eq.s32.totalorder %s16, 1
      %p97 = por %p95, %p96
      %p98 = scmp.ne.s32.totalorder %s89, %s90
      %p99 = scmp.eq.s32.totalorder %s16, 0
      %p100 = por %p98, %p99
      %p101 = scmp.ne.s32.totalorder %s89, %s90
      %p102 = scmp.eq.s32.totalorder %s17, 1
      %p103 = por %p101, %p102
      %p105 = scmp.ne.s32.totalorder %s90, %s104
      %p106 = scmp.eq.s32.totalorder %s17, 0
      %p107 = por %p105, %p106
      %s109 = sadd.s32 %s108, 1
      %p112 = scmp.eq.s32.totalorder %s11, 1
      %p113 = scmp.ne.s32.totalorder %s108, %s110
      %p114 = scmp.eq.s32.totalorder %s11, 0
      %p115 = por %p113, %p114
      %p116 = scmp.ne.s32.totalorder %s108, %s110
      %p117 = scmp.eq.s32.totalorder %s16, 1
      %p118 = por %p116, %p117
      %p119 = scmp.ne.s32.totalorder %s110, %s111
      %p120 = scmp.eq.s32.totalorder %s16, 0
      %p121 = por %p119, %p120
      %p122 = scmp.ne.s32.totalorder %s110, %s111
      %p123 = scmp.eq.s32.totalorder %s17, 1
      %p124 = por %p122, %p123
      %p126 = scmp.ne.s32.totalorder %s111, %s125
      %p127 = scmp.eq.s32.totalorder %s17, 0
      %p128 = por %p126, %p127
      %s129 = ssub.s32 %s11, %s18
      %p130 = scmp.eq.s32.totalorder %s129, 0
      %s132 = sadd.s32 %s131, 1
      %s133 = scalar_select %p130, %s131, %s132
      %p136 = pneg %p130
      %p137 = scmp.eq.s32.totalorder %s11, 1
      %p138 = por %p136, %p137
      %p139 = scmp.ne.s32.totalorder %s131, %s134
      %p140 = scmp.eq.s32.totalorder %s11, 0
      %p141 = por %p139, %p140
      %p142 = scmp.ne.s32.totalorder %s131, %s134
      %p143 = scmp.eq.s32.totalorder %s16, 1
      %p144 = por %p142, %p143
      %p145 = scmp.ne.s32.totalorder %s134, %s135
      %p146 = scmp.eq.s32.totalorder %s16, 0
      %p147 = por %p145, %p146
      %p148 = scmp.ne.s32.totalorder %s134, %s135
      %p149 = scmp.eq.s32.totalorder %s17, 1
      %p150 = por %p148, %p149
      %p152 = scmp.ne.s32.totalorder %s135, %s151
      %p153 = scmp.eq.s32.totalorder %s17, 0
      %p154 = por %p152, %p153
      %p155 = scmp.le.s32.totalorder 1, %s11
      %p156 = scmp.lt.s32.totalorder %s11, 3
      %p157 = pnand %p155, %p156
      %p158 = pneg %p157
      // Predicated region
      $region9: #{scr_forward.1} parent=5 // pred_check
        _
      $region10: #{scr_forward.1} parent=5 // pred_check_branch
        %160 = sbr.rel (%p157) target = $region12
      $region11: #{scr_forward.1} parent=5 // pred_region
        %s161 = ssub.s32 %s11, 1
        // Predicated region
        $region13: #{scr_forward.1} parent=11 // pred_check
          %p162 = pneg %p58
        $region14: #{scr_forward.1} parent=11 // pred_check_branch
          %164 = sbr.rel (%p162) target = $region16
        $region15: #{scr_forward.1} parent=11 // pred_region
          _
        $region16: #{scr_forward.1} parent=11 // pred_fallthru
          _
        // Predicated region
        $region17: #{scr_forward.1} parent=11 // pred_check
          %p165 = pneg %p79
        $region18: #{scr_forward.1} parent=11 // pred_check_branch
          %167 = sbr.rel (%p165) target = $region20
        $region19: #{scr_forward.1} parent=11 // pred_region
          _
        $region20: #{scr_forward.1} parent=11 // pred_fallthru
          _
        // Predicated region
        $region21: #{scr_forward.1} parent=11 // pred_check
          %p168 = pneg %p100
        $region22: #{scr_forward.1} parent=11 // pred_check_branch
          %170 = sbr.rel (%p168) target = $region24
        $region23: #{scr_forward.1} parent=11 // pred_region
          _
        $region24: #{scr_forward.1} parent=11 // pred_fallthru
          _
        // Predicated region
        $region25: #{scr_forward.1} parent=11 // pred_check
          %p171 = pneg %p121
        $region26: #{scr_forward.1} parent=11 // pred_check_branch
          %173 = sbr.rel (%p171) target = $region28
        $region27: #{scr_forward.1} parent=11 // pred_region
          _
        $region28: #{scr_forward.1} parent=11 // pred_fallthru
          _
      $region12: #{scr_forward.1} parent=5 // pred_fallthru
        _
      %p174 = scmp.lt.s32.totalorder %s11, 2
      // Predicated region
      $region29: #{scr_forward.1} parent=5 // pred_check
        %p175 = pneg %p174
      $region30: #{scr_forward.1} parent=5 // pred_check_branch
        %177 = sbr.rel (%p175) target = $region32
      $region31: #{scr_forward.1} parent=5 // pred_region
        // Predicated region
        $region33: #{scr_forward.1} parent=31 // pred_check
          %p178 = pneg %p31
        $region34: #{scr_forward.1} parent=31 // pred_check_branch
          %180 = sbr.rel (%p178) target = $region36
        $region35: #{scr_forward.1} parent=31 // pred_region
          %p181 = scmp.lt.s32.totalorder %s11, 1
          %s182 = scalar_select %p181, %s11, 1
          %s183 = smul.addr %s182, 36
          %s184 = smul.addr %s183, 8
          %s185 = scalar_lea.vmem %s0, %s184
        $region36: #{scr_forward.1} parent=31 // pred_fallthru
          _
      $region32: #{scr_forward.1} parent=5 // pred_fallthru
        _
      %p186 = scmp.le.s32.totalorder 1, %s11
      %p187 = scmp.lt.s32.totalorder %s11, 3
      %p188 = pnand %p186, %p187
      %p189 = pneg %p188
      // Predicated region
      $region37: #{scr_forward.1} parent=5 // pred_check
        _
      $region38: #{scr_forward.1} parent=5 // pred_check_branch
        %191 = sbr.rel (%p188) target = $region40
      $region39: #{scr_forward.1} parent=5 // pred_region
        %s192 = ssub.s32 %s11, 1
        %p193 = scmp.lt.s32.totalorder %s16, 1
        %s194 = scalar_select %p193, %s16, 1
        %s195 = smul.addr %s194, 36
        %s196 = smul.addr %s195, 8
        %s197 = scalar_lea.vmem %s0, %s196
        %p198 = pneg %p37
        %p199 = pneg %p34
        %p200 = pneg %p58
        %p201 = pneg %p55
        %p202 = pneg %p79
        %p203 = pneg %p76
        %p204 = pneg %p100
        %p205 = pneg %p97
        %p206 = pneg %p121
        %p207 = pneg %p118
        %p208 = pneg %p147
        %p209 = pneg %p144
        %s210 = sand.u32 %s134, 1
        %s211 = sand.u32 %s134, 1
        %s212 = smul.addr %s211, 32
        %s213 = scalar_lea.vmem [#allocation3], %s212
        %p214 = scmp.lt.s32.totalorder %s16, 1
        %s215 = scalar_select %p214, %s16, 1
        %s216 = smul.addr %s215, 36
        %s217 = smul.addr %s216, 8
        %s218 = scalar_lea.vmem %s0, %s217
        %s219 = smul.u32 2, %s16
        %v220 = vld [vmem:[%s4] sm:$0xff]
        %v221 = vld [vmem:[%s4 + $0x8] sm:$0xff]
        %v222 = vld [vmem:[%s4 + $0x10] sm:$0xff]
        %v223 = vld [vmem:[%s4 + $0x18] sm:$0xff]
        %v224 = vld [vmem:[%s4 + $0x20] sm:$0xff]
        %v225 = vld [vmem:[%s4 + $0x28] sm:$0xff]
        %v226 = vld [vmem:[%s4 + $0x30] sm:$0xff]
        %v227 = vld [vmem:[%s4 + $0x38] sm:$0xff]
        %v228 = vld [vmem:[%s4 + $0x40] sm:$0xff]
        %v229 = vld [vmem:[%s4 + $0x48] sm:$0xff]
        %v230 = vld [vmem:[%s4 + $0x50] sm:$0xff]
        %v231 = vld [vmem:[%s4 + $0x58] sm:$0xff]
        %v232 = vld [vmem:[%s4 + $0x60] sm:$0xff]
        %v233 = vld [vmem:[%s4 + $0x68] sm:$0xff]
        %v234 = vld [vmem:[%s4 + $0x70] sm:$0xff]
        %v235 = vld [vmem:[%s4 + $0x78] sm:$0xff]
        %v236 = vld [vmem:[%s4 + $0x80] sm:$0xff]
        %v237 = vld [vmem:[%s4 + $0x88] sm:$0xff]
        %v238 = vld [vmem:[%s1] sm:$0xff]
        %v239 = vld [vmem:[%s1 + $0x8] sm:$0xff]
        %v240 = vld [vmem:[%s1 + $0x10] sm:$0xff]
        %v241 = vld [vmem:[%s1 + $0x18] sm:$0xff]
        %v242 = vld [vmem:[%s1 + $0x20] sm:$0xff]
        %v243 = vld [vmem:[%s1 + $0x28] sm:$0xff]
        %v244 = vld [vmem:[%s1 + $0x30] sm:$0xff]
        %v245 = vld [vmem:[%s1 + $0x38] sm:$0xff]
        %v246 = vld [vmem:[%s218] sm:$0xff]
        %v247 = vld [vmem:[%s218 + $0x8] sm:$0xff]
        %v248 = vld [vmem:[%s218 + $0x10] sm:$0xff]
        %v249 = vld [vmem:[%s218 + $0x18] sm:$0xff]
        %v250 = vld [vmem:[%s218 + $0x20] sm:$0xff]
        %v251 = vld [vmem:[%s218 + $0x28] sm:$0xff]
        %v252 = vld [vmem:[%s218 + $0x30] sm:$0xff]
        %v253 = vld [vmem:[%s218 + $0x38] sm:$0xff]
        %v254 = vld [vmem:[%s218 + $0x40] sm:$0xff]
        %v255 = vld [vmem:[%s218 + $0x48] sm:$0xff]
        %v256 = vld [vmem:[%s218 + $0x50] sm:$0xff]
        %v257 = vld [vmem:[%s218 + $0x58] sm:$0xff]
        %v258 = vld [vmem:[%s218 + $0x60] sm:$0xff]
        %v259 = vld [vmem:[%s218 + $0x68] sm:$0xff]
        %v260 = vld [vmem:[%s218 + $0x70] sm:$0xff]
        %v261 = vld [vmem:[%s218 + $0x78] sm:$0xff]
        %v262 = vld [vmem:[%s218 + $0x80] sm:$0xff]
        %v263 = vld [vmem:[%s218 + $0x88] sm:$0xff]
        %v264 = vld [vmem:[%s218 + $0x90] sm:$0xff]
        %v265 = vld [vmem:[%s218 + $0x98] sm:$0xff]
        %v266 = vld [vmem:[%s218 + $0xa0] sm:$0xff]
        %v267 = vld [vmem:[%s218 + $0xa8] sm:$0xff]
        %v268 = vld [vmem:[%s218 + $0xb0] sm:$0xff]
        %v269 = vld [vmem:[%s218 + $0xb8] sm:$0xff]
        %v270 = vld [vmem:[%s218 + $0xc0] sm:$0xff]
        %v271 = vld [vmem:[%s218 + $0xc8] sm:$0xff]
        %v272 = vld [vmem:[%s218 + $0xd0] sm:$0xff]
        %v273 = vld [vmem:[%s218 + $0xd8] sm:$0xff]
        %v274 = vld [vmem:[%s218 + $0xe0] sm:$0xff]
        %v275 = vld [vmem:[%s218 + $0xe8] sm:$0xff]
        %v276 = vld [vmem:[%s218 + $0xf0] sm:$0xff]
        %v277 = vld [vmem:[%s218 + $0xf8] sm:$0xff]
        %v278 = vld [vmem:[%s218 + $0x100] sm:$0xff]
        %v279 = vld [vmem:[%s218 + $0x108] sm:$0xff]
        %v280 = vld [vmem:[%s218 + $0x110] sm:$0xff]
        %v281 = vld [vmem:[%s218 + $0x118] sm:$0xff]
        %283 = vset.pattern.permute.xlu0 0
        %284 = vperm.xlu0 %283, %v220
        %v285 = vpop.permute.xlu0 %284
        %288 = vset.pattern.permute.xlu0 0
        %289 = vperm.xlu0 %288, %v221
        %v290 = vpop.permute.xlu0 %289
        %293 = vset.pattern.permute.xlu0 0
        %294 = vperm.xlu0 %293, %v222
        %v295 = vpop.permute.xlu0 %294
        %298 = vset.pattern.permute.xlu0 0
        %299 = vperm.xlu0 %298, %v223
        %v300 = vpop.permute.xlu0 %299
        %303 = vset.pattern.permute.xlu0 0
        %304 = vperm.xlu0 %303, %v224
        %v305 = vpop.permute.xlu0 %304
        %308 = vset.pattern.permute.xlu0 0
        %309 = vperm.xlu0 %308, %v225
        %v310 = vpop.permute.xlu0 %309
        %313 = vset.pattern.permute.xlu0 0
        %314 = vperm.xlu0 %313, %v226
        %v315 = vpop.permute.xlu0 %314
        %318 = vset.pattern.permute.xlu0 0
        %319 = vperm.xlu0 %318, %v227
        %v320 = vpop.permute.xlu0 %319
        %vm322 = vcmask 130048
        %v324 = vsel %vm322, %v238, 0
        %v327 = vsel %vm322, %v239, 0
        %v330 = vsel %vm322, %v240, 0
        %v333 = vsel %vm322, %v241, 0
        %v336 = vsel %vm322, %v242, 0
        %v339 = vsel %vm322, %v243, 0
        %v342 = vsel %vm322, %v244, 0
        %v345 = vsel %vm322, %v245, 0
        %347 = vmatprep.subr.mxu0 %v247
        %348 = vmatpush1.msra.mxu0 %v246
        %349 = vmatprep.subr.mxu0 %v265
        %350 = vmatpush1.msra.mxu0 %v264
        %351 = vmatprep.subr.mxu0 0.0
        %352 = vmatpush1.msra.mxu0 0.0
        %353 = vmatprep.subr.mxu0 0.0
        %354 = vmatpush1.msra.mxu0 0.0
        %355 = vmatprep.subr.mxu0 0.0
        %356 = vmatpush1.msra.mxu0 0.0
        %357 = vmatprep.subr.mxu0 0.0
        %358 = vmatpush1.msra.mxu0 0.0
        %359 = vmatprep.subr.mxu0 0.0
        %360 = vmatpush1.msra.mxu0 0.0
        %361 = vmatprep.subr.mxu0 0.0
        %362 = vmatpush1.msra.mxu0 0.0
        %363 = vmatprep.subr.mxu0 0.0
        %364 = vmatpush1.msra.mxu0 0.0
        %365 = vmatprep.subr.mxu0 0.0
        %366 = vmatpush1.msra.mxu0 0.0
        %367 = vmatprep.subr.mxu0 0.0
        %368 = vmatpush1.msra.mxu0 0.0
        %369 = vmatprep.subr.mxu0 0.0
        %370 = vmatpush1.msra.mxu0 0.0
        %371 = vmatprep.subr.mxu0 0.0
        %372 = vmatpush1.msra.mxu0 0.0
        %373 = vmatprep.subr.mxu0 0.0
        %374 = vmatpush1.msra.mxu0 0.0
        %375 = vmatprep.subr.mxu0 0.0
        %376 = vmatpush1.msra.mxu0 0.0
        %377 = vmatprep.subr.mxu0 0.0
        %378 = vmatpush1.msra.mxu0 0.0
        %379 = vmatprep.subr.mxu0 0.0
        %380 = vmatpush1.msra.mxu0 0.0
        %381 = vmatprep.subr.mxu0 0.0
        %382 = vmatpush1.msra.mxu0 0.0
        %383 = vmatprep.subr.mxu0 0.0
        %384 = vmatpush1.msra.mxu0 0.0
        %385 = vmatprep.subr.mxu0 0.0
        %386 = vmatpush1.msra.mxu0 0.0
        %387 = vmatprep.subr.mxu0 0.0
        %388 = vmatpush1.msra.mxu0 0.0
        %389 = vmatprep.subr.mxu0 0.0
        %390 = vmatpush1.msra.mxu0 0.0
        %391 = vmatprep.subr.mxu0 0.0
        %392 = vmatpush1.msra.mxu0 0.0
        %393 = vmatprep.subr.mxu0 0.0
        %394 = vmatpush1.msra.mxu0 0.0
        %395 = vmatprep.subr.mxu0 0.0
        %396 = vmatpush1.msra.mxu0 0.0
        %397 = vmatprep.subr.mxu0 0.0
        %398 = vmatpush1.msra.mxu0 0.0
        %399 = vmatprep.subr.mxu0 0.0
        %400 = vmatpush1.msra.mxu0 0.0
        %401 = vmatprep.subr.mxu0 0.0
        %402 = vmatpush1.msra.mxu0 0.0
        %403 = vmatprep.subr.mxu0 0.0
        %404 = vmatpush1.msra.mxu0 0.0
        %405 = vmatprep.subr.mxu0 0.0
        %406 = vmatpush1.msra.mxu0 0.0
        %407 = vmatprep.subr.mxu0 0.0
        %408 = vmatpush1.msra.mxu0 0.0
        %409 = vmatprep.subr.mxu0 0.0
        %410 = vmatpush1.msra.mxu0 0.0
        %411 = vmatprep.mubr.f32.mxu0 0.0
        %412 = vmatmul.mubr.f32.gmra.mrb[0].mxu0 %v324
        %v413 = vpop.f32.mrb[0].mxu0
        %v414 = vadd.f32 %v285, %v413
        %v415 = vpop.f32.mrb[0].mxu0
        %v416 = vadd.f32 %v285, %v415
        %417 = vmatprep.mubr.f32.mxu0 0.0
        %418 = vmatmul.mubr.f32.gmra.mrb[0].mxu0 %v327
        %v419 = vpop.f32.mrb[0].mxu0
        %v420 = vadd.f32 %v290, %v419
        %v421 = vpop.f32.mrb[0].mxu0
        %v422 = vadd.f32 %v290, %v421
        %423 = vmatprep.mubr.f32.mxu0 0.0
        %424 = vmatmul.mubr.f32.gmra.mrb[0].mxu0 %v330
        %v425 = vpop.f32.mrb[0].mxu0
        %v426 = vadd.f32 %v295, %v425
        %v427 = vpop.f32.mrb[0].mxu0
        %v428 = vadd.f32 %v295, %v427
        %429 = vmatprep.mubr.f32.mxu0 0.0
        %430 = vmatmul.mubr.f32.gmra.mrb[0].mxu0 %v333
        %v431 = vpop.f32.mrb[0].mxu0
        %v432 = vadd.f32 %v300, %v431
        %v433 = vpop.f32.mrb[0].mxu0
        %v434 = vadd.f32 %v300, %v433
        %435 = vmatprep.mubr.f32.mxu0 0.0
        %436 = vmatmul.mubr.f32.gmra.mrb[0].mxu0 %v336
        %v437 = vpop.f32.mrb[0].mxu0
        %v438 = vadd.f32 %v305, %v437
        %v439 = vpop.f32.mrb[0].mxu0
        %v440 = vadd.f32 %v305, %v439
        %441 = vmatprep.mubr.f32.mxu0 0.0
        %442 = vmatmul.mubr.f32.gmra.mrb[0].mxu0 %v339
        %v443 = vpop.f32.mrb[0].mxu0
        %v444 = vadd.f32 %v310, %v443
        %v445 = vpop.f32.mrb[0].mxu0
        %v446 = vadd.f32 %v310, %v445
        %447 = vmatprep.mubr.f32.mxu0 0.0
        %448 = vmatmul.mubr.f32.gmra.mrb[0].mxu0 %v342
        %v449 = vpop.f32.mrb[0].mxu0
        %v450 = vadd.f32 %v315, %v449
        %v451 = vpop.f32.mrb[0].mxu0
        %v452 = vadd.f32 %v315, %v451
        %453 = vmatprep.mubr.f32.mxu0 0.0
        %454 = vmatmul.mubr.f32.gmra.mrb[0].mxu0 %v345
        %v455 = vpop.f32.mrb[0].mxu0
        %v456 = vadd.f32 %v320, %v455
        %v457 = vpop.f32.mrb[0].mxu0
        %v458 = vadd.f32 %v320, %v457
        %459 = vdwg.mxu0
        %460 = vmatprep.subr.mxu0 %v249
        %461 = vmatpush1.msra.mxu0 %v248
        %462 = vmatprep.subr.mxu0 %v267
        %463 = vmatpush1.msra.mxu0 %v266
        %464 = vmatprep.subr.mxu0 0.0
        %465 = vmatpush1.msra.mxu0 0.0
        %466 = vmatprep.subr.mxu0 0.0
        %467 = vmatpush1.msra.mxu0 0.0
        %468 = vmatprep.subr.mxu0 0.0
        %469 = vmatpush1.msra.mxu0 0.0
        %470 = vmatprep.subr.mxu0 0.0
        %471 = vmatpush1.msra.mxu0 0.0
        %472 = vmatprep.subr.mxu0 0.0
        %473 = vmatpush1.msra.mxu0 0.0
        %474 = vmatprep.subr.mxu0 0.0
        %475 = vmatpush1.msra.mxu0 0.0
        %476 = vmatprep.subr.mxu0 0.0
        %477 = vmatpush1.msra.mxu0 0.0
        %478 = vmatprep.subr.mxu0 0.0
        %479 = vmatpush1.msra.mxu0 0.0
        %480 = vmatprep.subr.mxu0 0.0
        %481 = vmatpush1.msra.mxu0 0.0
        %482 = vmatprep.subr.mxu0 0.0
        %483 = vmatpush1.msra.mxu0 0.0
        %484 = vmatprep.subr.mxu0 0.0
        %485 = vmatpush1.msra.mxu0 0.0
        %486 = vmatprep.subr.mxu0 0.0
        %487 = vmatpush1.msra.mxu0 0.0
        %488 = vmatprep.subr.mxu0 0.0
        %489 = vmatpush1.msra.mxu0 0.0
        %490 = vmatprep.subr.mxu0 0.0
        %491 = vmatpush1.msra.mxu0 0.0
        %492 = vmatprep.subr.mxu0 0.0
        %493 = vmatpush1.msra.mxu0 0.0
        %494 = vmatprep.subr.mxu0 0.0
        %495 = vmatpush1.msra.mxu0 0.0
        %496 = vmatprep.subr.mxu0 0.0
        %497 = vmatpush1.msra.mxu0 0.0
        %498 = vmatprep.subr.mxu0 0.0
        %499 = vmatpush1.msra.mxu0 0.0
        %500 = vmatprep.subr.mxu0 0.0
        %501 = vmatpush1.msra.mxu0 0.0
        %502 = vmatprep.subr.mxu0 0.0
        %503 = vmatpush1.msra.mxu0 0.0
        %504 = vmatprep.subr.mxu0 0.0
        %505 = vmatpush1.msra.mxu0 0.0
        %506 = vmatprep.subr.mxu0 0.0
        %507 = vmatpush1.msra.mxu0 0.0
        %508 = vmatprep.subr.mxu0 0.0
        %509 = vmatpush1.msra.mxu0 0.0
        %510 = vmatprep.subr.mxu0 0.0
        %511 = vmatpush1.msra.mxu0 0.0
        %512 = vmatprep.subr.mxu0 0.0
        %513 = vmatpush1.msra.mxu0 0.0
        %514 = vmatprep.subr.mxu0 0.0
        %515 = vmatpush1.msra.mxu0 0.0
        %516 = vmatprep.subr.mxu0 0.0
        %517 = vmatpush1.msra.mxu0 0.0
        %518 = vmatprep.subr.mxu0 0.0
        %519 = vmatpush1.msra.mxu0 0.0
        %520 = vmatprep.subr.mxu0 0.0
        %521 = vmatpush1.msra.mxu0 0.0
        %522 = vmatprep.subr.mxu0 0.0
        %523 = vmatpush1.msra.mxu0 0.0
        %524 = vmatprep.mubr.f32.mxu0 0.0
        %525 = vmatmul.mubr.f32.gmra.mrb[0].mxu0 %v324
        %v526 = vpop.f32.mrb[0].mxu0
        %v527 = vadd.f32 %v285, %v526
        %v528 = vpop.f32.mrb[0].mxu0
        %v529 = vadd.f32 %v285, %v528
        %530 = vmatprep.mubr.f32.mxu0 0.0
        %531 = vmatmul.mubr.f32.gmra.mrb[0].mxu0 %v327
        %v532 = vpop.f32.mrb[0].mxu0
        %v533 = vadd.f32 %v290, %v532
        %v534 = vpop.f32.mrb[0].mxu0
        %v535 = vadd.f32 %v290, %v534
        %536 = vmatprep.mubr.f32.mxu0 0.0
        %537 = vmatmul.mubr.f32.gmra.mrb[0].mxu0 %v330
        %v538 = vpop.f32.mrb[0].mxu0
        %v539 = vadd.f32 %v295, %v538
        %v540 = vpop.f32.mrb[0].mxu0
        %v541 = vadd.f32 %v295, %v540
        %542 = vmatprep.mubr.f32.mxu0 0.0
        %543 = vmatmul.mubr.f32.gmra.mrb[0].mxu0 %v333
        %v544 = vpop.f32.mrb[0].mxu0
        %v545 = vadd.f32 %v300, %v544
        %v546 = vpop.f32.mrb[0].mxu0
        %v547 = vadd.f32 %v300, %v546
        %548 = vmatprep.mubr.f32.mxu0 0.0
        %549 = vmatmul.mubr.f32.gmra.mrb[0].mxu0 %v336
        %v550 = vpop.f32.mrb[0].mxu0
        %v551 = vadd.f32 %v305, %v550
        %v552 = vpop.f32.mrb[0].mxu0
        %v553 = vadd.f32 %v305, %v552
        %554 = vmatprep.mubr.f32.mxu0 0.0
        %555 = vmatmul.mubr.f32.gmra.mrb[0].mxu0 %v339
        %v556 = vpop.f32.mrb[0].mxu0
        %v557 = vadd.f32 %v310, %v556
        %v558 = vpop.f32.mrb[0].mxu0
        %v559 = vadd.f32 %v310, %v558
        %560 = vmatprep.mubr.f32.mxu0 0.0
        %561 = vmatmul.mubr.f32.gmra.mrb[0].mxu0 %v342
        %v562 = vpop.f32.mrb[0].mxu0
        %v563 = vadd.f32 %v315, %v562
        %v564 = vpop.f32.mrb[0].mxu0
        %v565 = vadd.f32 %v315, %v564
        %566 = vmatprep.mubr.f32.mxu0 0.0
        %567 = vmatmul.mubr.f32.gmra.mrb[0].mxu0 %v345
        %v568 = vpop.f32.mrb[0].mxu0
        %v569 = vadd.f32 %v320, %v568
        %v570 = vpop.f32.mrb[0].mxu0
        %v571 = vadd.f32 %v320, %v570
        %572 = vdwg.mxu0
        %573 = vmatprep.subr.mxu0 %v251
        %574 = vmatpush1.msra.mxu0 %v250
        %575 = vmatprep.subr.mxu0 %v269
        %576 = vmatpush1.msra.mxu0 %v268
        %577 = vmatprep.subr.mxu0 0.0
        %578 = vmatpush1.msra.mxu0 0.0
        %579 = vmatprep.subr.mxu0 0.0
        %580 = vmatpush1.msra.mxu0 0.0
        %581 = vmatprep.subr.mxu0 0.0
        %582 = vmatpush1.msra.mxu0 0.0
        %583 = vmatprep.subr.mxu0 0.0
        %584 = vmatpush1.msra.mxu0 0.0
        %585 = vmatprep.subr.mxu0 0.0
        %586 = vmatpush1.msra.mxu0 0.0
        %587 = vmatprep.subr.mxu0 0.0
        %588 = vmatpush1.msra.mxu0 0.0
        %589 = vmatprep.subr.mxu0 0.0
        %590 = vmatpush1.msra.mxu0 0.0
        %591 = vmatprep.subr.mxu0 0.0
        %592 = vmatpush1.msra.mxu0 0.0
        %593 = vmatprep.subr.mxu0 0.0
        %594 = vmatpush1.msra.mxu0 0.0
        %595 = vmatprep.subr.mxu0 0.0
        %596 = vmatpush1.msra.mxu0 0.0
        %597 = vmatprep.subr.mxu0 0.0
        %598 = vmatpush1.msra.mxu0 0.0
        %599 = vmatprep.subr.mxu0 0.0
        %600 = vmatpush1.msra.mxu0 0.0
        %601 = vmatprep.subr.mxu0 0.0
        %602 = vmatpush1.msra.mxu0 0.0
        %603 = vmatprep.subr.mxu0 0.0
        %604 = vmatpush1.msra.mxu0 0.0
        %605 = vmatprep.subr.mxu0 0.0
        %606 = vmatpush1.msra.mxu0 0.0
        %607 = vmatprep.subr.mxu0 0.0
        %608 = vmatpush1.msra.mxu0 0.0
        %609 = vmatprep.subr.mxu0 0.0
        %610 = vmatpush1.msra.mxu0 0.0
        %611 = vmatprep.subr.mxu0 0.0
        %612 = vmatpush1.msra.mxu0 0.0
        %613 = vmatprep.subr.mxu0 0.0
        %614 = vmatpush1.msra.mxu0 0.0
        %615 = vmatprep.subr.mxu0 0.0
        %616 = vmatpush1.msra.mxu0 0.0
        %617 = vmatprep.subr.mxu0 0.0
        %618 = vmatpush1.msra.mxu0 0.0
        %619 = vmatprep.subr.mxu0 0.0
        %620 = vmatpush1.msra.mxu0 0.0
        %621 = vmatprep.subr.mxu0 0.0
        %622 = vmatpush1.msra.mxu0 0.0
        %623 = vmatprep.subr.mxu0 0.0
        %624 = vmatpush1.msra.mxu0 0.0
        %625 = vmatprep.subr.mxu0 0.0
        %626 = vmatpush1.msra.mxu0 0.0
        %627 = vmatprep.subr.mxu0 0.0
        %628 = vmatpush1.msra.mxu0 0.0
        %629 = vmatprep.subr.mxu0 0.0
        %630 = vmatpush1.msra.mxu0 0.0
        %631 = vmatprep.subr.mxu0 0.0
        %632 = vmatpush1.msra.mxu0 0.0
        %633 = vmatprep.subr.mxu0 0.0
        %634 = vmatpush1.msra.mxu0 0.0
        %635 = vmatprep.subr.mxu0 0.0
        %636 = vmatpush1.msra.mxu0 0.0
        %637 = vmatprep.mubr.f32.mxu0 0.0
        %638 = vmatmul.mubr.f32.gmra.mrb[0].mxu0 %v324
        %v639 = vpop.f32.mrb[0].mxu0
        %v640 = vadd.f32 %v285, %v639
        %v641 = vpop.f32.mrb[0].mxu0
        %v642 = vadd.f32 %v285, %v641
        %643 = vmatprep.mubr.f32.mxu0 0.0
        %644 = vmatmul.mubr.f32.gmra.mrb[0].mxu0 %v327
        %v645 = vpop.f32.mrb[0].mxu0
        %v646 = vadd.f32 %v290, %v645
        %v647 = vpop.f32.mrb[0].mxu0
        %v648 = vadd.f32 %v290, %v647
        %649 = vmatprep.mubr.f32.mxu0 0.0
        %650 = vmatmul.mubr.f32.gmra.mrb[0].mxu0 %v330
        %v651 = vpop.f32.mrb[0].mxu0
        %v652 = vadd.f32 %v295, %v651
        %v653 = vpop.f32.mrb[0].mxu0
        %v654 = vadd.f32 %v295, %v653
        %655 = vmatprep.mubr.f32.mxu0 0.0
        %656 = vmatmul.mubr.f32.gmra.mrb[0].mxu0 %v333
        %v657 = vpop.f32.mrb[0].mxu0
        %v658 = vadd.f32 %v300, %v657
        %v659 = vpop.f32.mrb[0].mxu0
        %v660 = vadd.f32 %v300, %v659
        %661 = vmatprep.mubr.f32.mxu0 0.0
        %662 = vmatmul.mubr.f32.gmra.mrb[0].mxu0 %v336
        %v663 = vpop.f32.mrb[0].mxu0
        %v664 = vadd.f32 %v305, %v663
        %v665 = vpop.f32.mrb[0].mxu0
        %v666 = vadd.f32 %v305, %v665
        %667 = vmatprep.mubr.f32.mxu0 0.0
        %668 = vmatmul.mubr.f32.gmra.mrb[0].mxu0 %v339
        %v669 = vpop.f32.mrb[0].mxu0
        %v670 = vadd.f32 %v310, %v669
        %v671 = vpop.f32.mrb[0].mxu0
        %v672 = vadd.f32 %v310, %v671
        %673 = vmatprep.mubr.f32.mxu0 0.0
        %674 = vmatmul.mubr.f32.gmra.mrb[0].mxu0 %v342
        %v675 = vpop.f32.mrb[0].mxu0
        %v676 = vadd.f32 %v315, %v675
        %v677 = vpop.f32.mrb[0].mxu0
        %v678 = vadd.f32 %v315, %v677
        %679 = vmatprep.mubr.f32.mxu0 0.0
        %680 = vmatmul.mubr.f32.gmra.mrb[0].mxu0 %v345
        %v681 = vpop.f32.mrb[0].mxu0
        %v682 = vadd.f32 %v320, %v681
        %v683 = vpop.f32.mrb[0].mxu0
        %v684 = vadd.f32 %v320, %v683
        %685 = vdwg.mxu0
        %686 = vmatprep.subr.mxu0 %v253
        %687 = vmatpush1.msra.mxu0 %v252
        %688 = vmatprep.subr.mxu0 %v271
        %689 = vmatpush1.msra.mxu0 %v270
        %690 = vmatprep.subr.mxu0 0.0
        %691 = vmatpush1.msra.mxu0 0.0
        %692 = vmatprep.subr.mxu0 0.0
        %693 = vmatpush1.msra.mxu0 0.0
        %694 = vmatprep.subr.mxu0 0.0
        %695 = vmatpush1.msra.mxu0 0.0
        %696 = vmatprep.subr.mxu0 0.0
        %697 = vmatpush1.msra.mxu0 0.0
        %698 = vmatprep.subr.mxu0 0.0
        %699 = vmatpush1.msra.mxu0 0.0
        %700 = vmatprep.subr.mxu0 0.0
        %701 = vmatpush1.msra.mxu0 0.0
        %702 = vmatprep.subr.mxu0 0.0
        %703 = vmatpush1.msra.mxu0 0.0
        %704 = vmatprep.subr.mxu0 0.0
        %705 = vmatpush1.msra.mxu0 0.0
        %706 = vmatprep.subr.mxu0 0.0
        %707 = vmatpush1.msra.mxu0 0.0
        %708 = vmatprep.subr.mxu0 0.0
        %709 = vmatpush1.msra.mxu0 0.0
        %710 = vmatprep.subr.mxu0 0.0
        %711 = vmatpush1.msra.mxu0 0.0
        %712 = vmatprep.subr.mxu0 0.0
        %713 = vmatpush1.msra.mxu0 0.0
        %714 = vmatprep.subr.mxu0 0.0
        %715 = vmatpush1.msra.mxu0 0.0
        %716 = vmatprep.subr.mxu0 0.0
        %717 = vmatpush1.msra.mxu0 0.0
        %718 = vmatprep.subr.mxu0 0.0
        %719 = vmatpush1.msra.mxu0 0.0
        %720 = vmatprep.subr.mxu0 0.0
        %721 = vmatpush1.msra.mxu0 0.0
        %722 = vmatprep.subr.mxu0 0.0
        %723 = vmatpush1.msra.mxu0 0.0
        %724 = vmatprep.subr.mxu0 0.0
        %725 = vmatpush1.msra.mxu0 0.0
        %726 = vmatprep.subr.mxu0 0.0
        %727 = vmatpush1.msra.mxu0 0.0
        %728 = vmatprep.subr.mxu0 0.0
        %729 = vmatpush1.msra.mxu0 0.0
        %730 = vmatprep.subr.mxu0 0.0
        %731 = vmatpush1.msra.mxu0 0.0
        %732 = vmatprep.subr.mxu0 0.0
        %733 = vmatpush1.msra.mxu0 0.0
        %734 = vmatprep.subr.mxu0 0.0
        %735 = vmatpush1.msra.mxu0 0.0
        %736 = vmatprep.subr.mxu0 0.0
        %737 = vmatpush1.msra.mxu0 0.0
        %738 = vmatprep.subr.mxu0 0.0
        %739 = vmatpush1.msra.mxu0 0.0
        %740 = vmatprep.subr.mxu0 0.0
        %741 = vmatpush1.msra.mxu0 0.0
        %742 = vmatprep.subr.mxu0 0.0
        %743 = vmatpush1.msra.mxu0 0.0
        %744 = vmatprep.subr.mxu0 0.0
        %745 = vmatpush1.msra.mxu0 0.0
        %746 = vmatprep.subr.mxu0 0.0
        %747 = vmatpush1.msra.mxu0 0.0
        %748 = vmatprep.subr.mxu0 0.0
        %749 = vmatpush1.msra.mxu0 0.0
        %750 = vmatprep.mubr.f32.mxu0 0.0
        %751 = vmatmul.mubr.f32.gmra.mrb[0].mxu0 %v324
        %v752 = vpop.f32.mrb[0].mxu0
        %v753 = vadd.f32 %v285, %v752
        %v754 = vpop.f32.mrb[0].mxu0
        %v755 = vadd.f32 %v285, %v754
        %756 = vmatprep.mubr.f32.mxu0 0.0
        %757 = vmatmul.mubr.f32.gmra.mrb[0].mxu0 %v327
        %v758 = vpop.f32.mrb[0].mxu0
        %v759 = vadd.f32 %v290, %v758
        %v760 = vpop.f32.mrb[0].mxu0
        %v761 = vadd.f32 %v290, %v760
        %762 = vmatprep.mubr.f32.mxu0 0.0
        %763 = vmatmul.mubr.f32.gmra.mrb[0].mxu0 %v330
        %v764 = vpop.f32.mrb[0].mxu0
        %v765 = vadd.f32 %v295, %v764
        %v766 = vpop.f32.mrb[0].mxu0
        %v767 = vadd.f32 %v295, %v766
        %768 = vmatprep.mubr.f32.mxu0 0.0
        %769 = vmatmul.mubr.f32.gmra.mrb[0].mxu0 %v333
        %v770 = vpop.f32.mrb[0].mxu0
        %v771 = vadd.f32 %v300, %v770
        %v772 = vpop.f32.mrb[0].mxu0
        %v773 = vadd.f32 %v300, %v772
        %774 = vmatprep.mubr.f32.mxu0 0.0
        %775 = vmatmul.mubr.f32.gmra.mrb[0].mxu0 %v336
        %v776 = vpop.f32.mrb[0].mxu0
        %v777 = vadd.f32 %v305, %v776
        %v778 = vpop.f32.mrb[0].mxu0
        %v779 = vadd.f32 %v305, %v778
        %780 = vmatprep.mubr.f32.mxu0 0.0
        %781 = vmatmul.mubr.f32.gmra.mrb[0].mxu0 %v339
        %v782 = vpop.f32.mrb[0].mxu0
        %v783 = vadd.f32 %v310, %v782
        %v784 = vpop.f32.mrb[0].mxu0
        %v785 = vadd.f32 %v310, %v784
        %786 = vmatprep.mubr.f32.mxu0 0.0
        %787 = vmatmul.mubr.f32.gmra.mrb[0].mxu0 %v342
        %v788 = vpop.f32.mrb[0].mxu0
        %v789 = vadd.f32 %v315, %v788
        %v790 = vpop.f32.mrb[0].mxu0
        %v791 = vadd.f32 %v315, %v790
        %792 = vmatprep.mubr.f32.mxu0 0.0
        %793 = vmatmul.mubr.f32.gmra.mrb[0].mxu0 %v345
        %v794 = vpop.f32.mrb[0].mxu0
        %v795 = vadd.f32 %v320, %v794
        %v796 = vpop.f32.mrb[0].mxu0
        %v797 = vadd.f32 %v320, %v796
        %798 = vdwg.mxu0
        %799 = vmatprep.subr.mxu0 %v255
        %800 = vmatpush1.msra.mxu0 %v254
        %801 = vmatprep.subr.mxu0 %v273
        %802 = vmatpush1.msra.mxu0 %v272
        %803 = vmatprep.subr.mxu0 0.0
        %804 = vmatpush1.msra.mxu0 0.0
        %805 = vmatprep.subr.mxu0 0.0
        %806 = vmatpush1.msra.mxu0 0.0
        %807 = vmatprep.subr.mxu0 0.0
        %808 = vmatpush1.msra.mxu0 0.0
        %809 = vmatprep.subr.mxu0 0.0
        %810 = vmatpush1.msra.mxu0 0.0
        %811 = vmatprep.subr.mxu0 0.0
        %812 = vmatpush1.msra.mxu0 0.0
        %813 = vmatprep.subr.mxu0 0.0
        %814 = vmatpush1.msra.mxu0 0.0
        %815 = vmatprep.subr.mxu0 0.0
        %816 = vmatpush1.msra.mxu0 0.0
        %817 = vmatprep.subr.mxu0 0.0
        %818 = vmatpush1.msra.mxu0 0.0
        %819 = vmatprep.subr.mxu0 0.0
        %820 = vmatpush1.msra.mxu0 0.0
        %821 = vmatprep.subr.mxu0 0.0
        %822 = vmatpush1.msra.mxu0 0.0
        %823 = vmatprep.subr.mxu0 0.0
        %824 = vmatpush1.msra.mxu0 0.0
        %825 = vmatprep.subr.mxu0 0.0
        %826 = vmatpush1.msra.mxu0 0.0
        %827 = vmatprep.subr.mxu0 0.0
        %828 = vmatpush1.msra.mxu0 0.0
        %829 = vmatprep.subr.mxu0 0.0
        %830 = vmatpush1.msra.mxu0 0.0
        %831 = vmatprep.subr.mxu0 0.0
        %832 = vmatpush1.msra.mxu0 0.0
        %833 = vmatprep.subr.mxu0 0.0
        %834 = vmatpush1.msra.mxu0 0.0
        %835 = vmatprep.subr.mxu0 0.0
        %836 = vmatpush1.msra.mxu0 0.0
        %837 = vmatprep.subr.mxu0 0.0
        %838 = vmatpush1.msra.mxu0 0.0
        %839 = vmatprep.subr.mxu0 0.0
        %840 = vmatpush1.msra.mxu0 0.0
        %841 = vmatprep.subr.mxu0 0.0
        %842 = vmatpush1.msra.mxu0 0.0
        %843 = vmatprep.subr.mxu0 0.0
        %844 = vmatpush1.msra.mxu0 0.0
        %845 = vmatprep.subr.mxu0 0.0
        %846 = vmatpush1.msra.mxu0 0.0
        %847 = vmatprep.subr.mxu0 0.0
        %848 = vmatpush1.msra.mxu0 0.0
        %849 = vmatprep.subr.mxu0 0.0
        %850 = vmatpush1.msra.mxu0 0.0
        %851 = vmatprep.subr.mxu0 0.0
        %852 = vmatpush1.msra.mxu0 0.0
        %853 = vmatprep.subr.mxu0 0.0
        %854 = vmatpush1.msra.mxu0 0.0
        %855 = vmatprep.subr.mxu0 0.0
        %856 = vmatpush1.msra.mxu0 0.0
        %857 = vmatprep.subr.mxu0 0.0
        %858 = vmatpush1.msra.mxu0 0.0
        %859 = vmatprep.subr.mxu0 0.0
        %860 = vmatpush1.msra.mxu0 0.0
        %861 = vmatprep.subr.mxu0 0.0
        %862 = vmatpush1.msra.mxu0 0.0
        %863 = vmatprep.mubr.f32.mxu0 0.0
        %864 = vmatmul.mubr.f32.gmra.mrb[0].mxu0 %v324
        %v865 = vpop.f32.mrb[0].mxu0
        %v866 = vadd.f32 %v285, %v865
        %v867 = vpop.f32.mrb[0].mxu0
        %v868 = vadd.f32 %v285, %v867
        %869 = vmatprep.mubr.f32.mxu0 0.0
        %870 = vmatmul.mubr.f32.gmra.mrb[0].mxu0 %v327
        %v871 = vpop.f32.mrb[0].mxu0
        %v872 = vadd.f32 %v290, %v871
        %v873 = vpop.f32.mrb[0].mxu0
        %v874 = vadd.f32 %v290, %v873
        %875 = vmatprep.mubr.f32.mxu0 0.0
        %876 = vmatmul.mubr.f32.gmra.mrb[0].mxu0 %v330
        %v877 = vpop.f32.mrb[0].mxu0
        %v878 = vadd.f32 %v295, %v877
        %v879 = vpop.f32.mrb[0].mxu0
        %v880 = vadd.f32 %v295, %v879
        %881 = vmatprep.mubr.f32.mxu0 0.0
        %882 = vmatmul.mubr.f32.gmra.mrb[0].mxu0 %v333
        %v883 = vpop.f32.mrb[0].mxu0
        %v884 = vadd.f32 %v300, %v883
        %v885 = vpop.f32.mrb[0].mxu0
        %v886 = vadd.f32 %v300, %v885
        %887 = vmatprep.mubr.f32.mxu0 0.0
        %888 = vmatmul.mubr.f32.gmra.mrb[0].mxu0 %v336
        %v889 = vpop.f32.mrb[0].mxu0
        %v890 = vadd.f32 %v305, %v889
        %v891 = vpop.f32.mrb[0].mxu0
        %v892 = vadd.f32 %v305, %v891
        %893 = vmatprep.mubr.f32.mxu0 0.0
        %894 = vmatmul.mubr.f32.gmra.mrb[0].mxu0 %v339
        %v895 = vpop.f32.mrb[0].mxu0
        %v896 = vadd.f32 %v310, %v895
        %v897 = vpop.f32.mrb[0].mxu0
        %v898 = vadd.f32 %v310, %v897
        %899 = vmatprep.mubr.f32.mxu0 0.0
        %900 = vmatmul.mubr.f32.gmra.mrb[0].mxu0 %v342
        %v901 = vpop.f32.mrb[0].mxu0
        %v902 = vadd.f32 %v315, %v901
        %v903 = vpop.f32.mrb[0].mxu0
        %v904 = vadd.f32 %v315, %v903
        %905 = vmatprep.mubr.f32.mxu0 0.0
        %906 = vmatmul.mubr.f32.gmra.mrb[0].mxu0 %v345
        %v907 = vpop.f32.mrb[0].mxu0
        %v908 = vadd.f32 %v320, %v907
        %v909 = vpop.f32.mrb[0].mxu0
        %v910 = vadd.f32 %v320, %v909
        %911 = vdwg.mxu0
        %912 = vmatprep.subr.mxu0 %v257
        %913 = vmatpush1.msra.mxu0 %v256
        %914 = vmatprep.subr.mxu0 %v275
        %915 = vmatpush1.msra.mxu0 %v274
        %916 = vmatprep.subr.mxu0 0.0
        %917 = vmatpush1.msra.mxu0 0.0
        %918 = vmatprep.subr.mxu0 0.0
        %919 = vmatpush1.msra.mxu0 0.0
        %920 = vmatprep.subr.mxu0 0.0
        %921 = vmatpush1.msra.mxu0 0.0
        %922 = vmatprep.subr.mxu0 0.0
        %923 = vmatpush1.msra.mxu0 0.0
        %924 = vmatprep.subr.mxu0 0.0
        %925 = vmatpush1.msra.mxu0 0.0
        %926 = vmatprep.subr.mxu0 0.0
        %927 = vmatpush1.msra.mxu0 0.0
        %928 = vmatprep.subr.mxu0 0.0
        %929 = vmatpush1.msra.mxu0 0.0
        %930 = vmatprep.subr.mxu0 0.0
        %931 = vmatpush1.msra.mxu0 0.0
        %932 = vmatprep.subr.mxu0 0.0
        %933 = vmatpush1.msra.mxu0 0.0
        %934 = vmatprep.subr.mxu0 0.0
        %935 = vmatpush1.msra.mxu0 0.0
        %936 = vmatprep.subr.mxu0 0.0
        %937 = vmatpush1.msra.mxu0 0.0
        %938 = vmatprep.subr.mxu0 0.0
        %939 = vmatpush1.msra.mxu0 0.0
        %940 = vmatprep.subr.mxu0 0.0
        %941 = vmatpush1.msra.mxu0 0.0
        %942 = vmatprep.subr.mxu0 0.0
        %943 = vmatpush1.msra.mxu0 0.0
        %944 = vmatprep.subr.mxu0 0.0
        %945 = vmatpush1.msra.mxu0 0.0
        %946 = vmatprep.subr.mxu0 0.0
        %947 = vmatpush1.msra.mxu0 0.0
        %948 = vmatprep.subr.mxu0 0.0
        %949 = vmatpush1.msra.mxu0 0.0
        %950 = vmatprep.subr.mxu0 0.0
        %951 = vmatpush1.msra.mxu0 0.0
        %952 = vmatprep.subr.mxu0 0.0
        %953 = vmatpush1.msra.mxu0 0.0
        %954 = vmatprep.subr.mxu0 0.0
        %955 = vmatpush1.msra.mxu0 0.0
        %956 = vmatprep.subr.mxu0 0.0
        %957 = vmatpush1.msra.mxu0 0.0
        %958 = vmatprep.subr.mxu0 0.0
        %959 = vmatpush1.msra.mxu0 0.0
        %960 = vmatprep.subr.mxu0 0.0
        %961 = vmatpush1.msra.mxu0 0.0
        %962 = vmatprep.subr.mxu0 0.0
        %963 = vmatpush1.msra.mxu0 0.0
        %964 = vmatprep.subr.mxu0 0.0
        %965 = vmatpush1.msra.mxu0 0.0
        %966 = vmatprep.subr.mxu0 0.0
        %967 = vmatpush1.msra.mxu0 0.0
        %968 = vmatprep.subr.mxu0 0.0
        %969 = vmatpush1.msra.mxu0 0.0
        %970 = vmatprep.subr.mxu0 0.0
        %971 = vmatpush1.msra.mxu0 0.0
        %972 = vmatprep.subr.mxu0 0.0
        %973 = vmatpush1.msra.mxu0 0.0
        %974 = vmatprep.subr.mxu0 0.0
        %975 = vmatpush1.msra.mxu0 0.0
        %976 = vmatprep.mubr.f32.mxu0 0.0
        %977 = vmatmul.mubr.f32.gmra.mrb[0].mxu0 %v324
        %v978 = vpop.f32.mrb[0].mxu0
        %v979 = vadd.f32 %v285, %v978
        %v980 = vpop.f32.mrb[0].mxu0
        %v981 = vadd.f32 %v285, %v980
        %982 = vmatprep.mubr.f32.mxu0 0.0
        %983 = vmatmul.mubr.f32.gmra.mrb[0].mxu0 %v327
        %v984 = vpop.f32.mrb[0].mxu0
        %v985 = vadd.f32 %v290, %v984
        %v986 = vpop.f32.mrb[0].mxu0
        %v987 = vadd.f32 %v290, %v986
        %988 = vmatprep.mubr.f32.mxu0 0.0
        %989 = vmatmul.mubr.f32.gmra.mrb[0].mxu0 %v330
        %v990 = vpop.f32.mrb[0].mxu0
        %v991 = vadd.f32 %v295, %v990
        %v992 = vpop.f32.mrb[0].mxu0
        %v993 = vadd.f32 %v295, %v992
        %994 = vmatprep.mubr.f32.mxu0 0.0
        %995 = vmatmul.mubr.f32.gmra.mrb[0].mxu0 %v333
        %v996 = vpop.f32.mrb[0].mxu0
        %v997 = vadd.f32 %v300, %v996
        %v998 = vpop.f32.mrb[0].mxu0
        %v999 = vadd.f32 %v300, %v998
        %1000 = vmatprep.mubr.f32.mxu0 0.0
        %1001 = vmatmul.mubr.f32.gmra.mrb[0].mxu0 %v336
        %v1002 = vpop.f32.mrb[0].mxu0
        %v1003 = vadd.f32 %v305, %v1002
        %v1004 = vpop.f32.mrb[0].mxu0
        %v1005 = vadd.f32 %v305, %v1004
        %1006 = vmatprep.mubr.f32.mxu0 0.0
        %1007 = vmatmul.mubr.f32.gmra.mrb[0].mxu0 %v339
        %v1008 = vpop.f32.mrb[0].mxu0
        %v1009 = vadd.f32 %v310, %v1008
        %v1010 = vpop.f32.mrb[0].mxu0
        %v1011 = vadd.f32 %v310, %v1010
        %1012 = vmatprep.mubr.f32.mxu0 0.0
        %1013 = vmatmul.mubr.f32.gmra.mrb[0].mxu0 %v342
        %v1014 = vpop.f32.mrb[0].mxu0
        %v1015 = vadd.f32 %v315, %v1014
        %v1016 = vpop.f32.mrb[0].mxu0
        %v1017 = vadd.f32 %v315, %v1016
        %1018 = vmatprep.mubr.f32.mxu0 0.0
        %1019 = vmatmul.mubr.f32.gmra.mrb[0].mxu0 %v345
        %v1020 = vpop.f32.mrb[0].mxu0
        %v1021 = vadd.f32 %v320, %v1020
        %v1022 = vpop.f32.mrb[0].mxu0
        %v1023 = vadd.f32 %v320, %v1022
        %1024 = vdwg.mxu0
        %1025 = vmatprep.subr.mxu0 %v259
        %1026 = vmatpush1.msra.mxu0 %v258
        %1027 = vmatprep.subr.mxu0 %v277
        %1028 = vmatpush1.msra.mxu0 %v276
        %1029 = vmatprep.subr.mxu0 0.0
        %1030 = vmatpush1.msra.mxu0 0.0
        %1031 = vmatprep.subr.mxu0 0.0
        %1032 = vmatpush1.msra.mxu0 0.0
        %1033 = vmatprep.subr.mxu0 0.0
        %1034 = vmatpush1.msra.mxu0 0.0
        %1035 = vmatprep.subr.mxu0 0.0
        %1036 = vmatpush1.msra.mxu0 0.0
        %1037 = vmatprep.subr.mxu0 0.0
        %1038 = vmatpush1.msra.mxu0 0.0
        %1039 = vmatprep.subr.mxu0 0.0
        %1040 = vmatpush1.msra.mxu0 0.0
        %1041 = vmatprep.subr.mxu0 0.0
        %1042 = vmatpush1.msra.mxu0 0.0
        %1043 = vmatprep.subr.mxu0 0.0
        %1044 = vmatpush1.msra.mxu0 0.0
        %1045 = vmatprep.subr.mxu0 0.0
        %1046 = vmatpush1.msra.mxu0 0.0
        %1047 = vmatprep.subr.mxu0 0.0
        %1048 = vmatpush1.msra.mxu0 0.0
        %1049 = vmatprep.subr.mxu0 0.0
        %1050 = vmatpush1.msra.mxu0 0.0
        %1051 = vmatprep.subr.mxu0 0.0
        %1052 = vmatpush1.msra.mxu0 0.0
        %1053 = vmatprep.subr.mxu0 0.0
        %1054 = vmatpush1.msra.mxu0 0.0
        %1055 = vmatprep.subr.mxu0 0.0
        %1056 = vmatpush1.msra.mxu0 0.0
        %1057 = vmatprep.subr.mxu0 0.0
        %1058 = vmatpush1.msra.mxu0 0.0
        %1059 = vmatprep.subr.mxu0 0.0
        %1060 = vmatpush1.msra.mxu0 0.0
        %1061 = vmatprep.subr.mxu0 0.0
        %1062 = vmatpush1.msra.mxu0 0.0
        %1063 = vmatprep.subr.mxu0 0.0
        %1064 = vmatpush1.msra.mxu0 0.0
        %1065 = vmatprep.subr.mxu0 0.0
        %1066 = vmatpush1.msra.mxu0 0.0
        %1067 = vmatprep.subr.mxu0 0.0
        %1068 = vmatpush1.msra.mxu0 0.0
        %1069 = vmatprep.subr.mxu0 0.0
        %1070 = vmatpush1.msra.mxu0 0.0
        %1071 = vmatprep.subr.mxu0 0.0
        %1072 = vmatpush1.msra.mxu0 0.0
        %1073 = vmatprep.subr.mxu0 0.0
        %1074 = vmatpush1.msra.mxu0 0.0
        %1075 = vmatprep.subr.mxu0 0.0
        %1076 = vmatpush1.msra.mxu0 0.0
        %1077 = vmatprep.subr.mxu0 0.0
        %1078 = vmatpush1.msra.mxu0 0.0
        %1079 = vmatprep.subr.mxu0 0.0
        %1080 = vmatpush1.msra.mxu0 0.0
        %1081 = vmatprep.subr.mxu0 0.0
        %1082 = vmatpush1.msra.mxu0 0.0
        %1083 = vmatprep.subr.mxu0 0.0
        %1084 = vmatpush1.msra.mxu0 0.0
        %1085 = vmatprep.subr.mxu0 0.0
        %1086 = vmatpush1.msra.mxu0 0.0
        %1087 = vmatprep.subr.mxu0 0.0
        %1088 = vmatpush1.msra.mxu0 0.0
        %1089 = vmatprep.mubr.f32.mxu0 0.0
        %1090 = vmatmul.mubr.f32.gmra.mrb[0].mxu0 %v324
        %v1091 = vpop.f32.mrb[0].mxu0
        %v1092 = vadd.f32 %v285, %v1091
        %v1093 = vpop.f32.mrb[0].mxu0
        %v1094 = vadd.f32 %v285, %v1093
        %1095 = vmatprep.mubr.f32.mxu0 0.0
        %1096 = vmatmul.mubr.f32.gmra.mrb[0].mxu0 %v327
        %v1097 = vpop.f32.mrb[0].mxu0
        %v1098 = vadd.f32 %v290, %v1097
        %v1099 = vpop.f32.mrb[0].mxu0
        %v1100 = vadd.f32 %v290, %v1099
        %1101 = vmatprep.mubr.f32.mxu0 0.0
        %1102 = vmatmul.mubr.f32.gmra.mrb[0].mxu0 %v330
        %v1103 = vpop.f32.mrb[0].mxu0
        %v1104 = vadd.f32 %v295, %v1103
        %v1105 = vpop.f32.mrb[0].mxu0
        %v1106 = vadd.f32 %v295, %v1105
        %1107 = vmatprep.mubr.f32.mxu0 0.0
        %1108 = vmatmul.mubr.f32.gmra.mrb[0].mxu0 %v333
        %v1109 = vpop.f32.mrb[0].mxu0
        %v1110 = vadd.f32 %v300, %v1109
        %v1111 = vpop.f32.mrb[0].mxu0
        %v1112 = vadd.f32 %v300, %v1111
        %1113 = vmatprep.mubr.f32.mxu0 0.0
        %1114 = vmatmul.mubr.f32.gmra.mrb[0].mxu0 %v336
        %v1115 = vpop.f32.mrb[0].mxu0
        %v1116 = vadd.f32 %v305, %v1115
        %v1117 = vpop.f32.mrb[0].mxu0
        %v1118 = vadd.f32 %v305, %v1117
        %1119 = vmatprep.mubr.f32.mxu0 0.0
        %1120 = vmatmul.mubr.f32.gmra.mrb[0].mxu0 %v339
        %v1121 = vpop.f32.mrb[0].mxu0
        %v1122 = vadd.f32 %v310, %v1121
        %v1123 = vpop.f32.mrb[0].mxu0
        %v1124 = vadd.f32 %v310, %v1123
        %1125 = vmatprep.mubr.f32.mxu0 0.0
        %1126 = vmatmul.mubr.f32.gmra.mrb[0].mxu0 %v342
        %v1127 = vpop.f32.mrb[0].mxu0
        %v1128 = vadd.f32 %v315, %v1127
        %v1129 = vpop.f32.mrb[0].mxu0
        %v1130 = vadd.f32 %v315, %v1129
        %1131 = vmatprep.mubr.f32.mxu0 0.0
        %1132 = vmatmul.mubr.f32.gmra.mrb[0].mxu0 %v345
        %v1133 = vpop.f32.mrb[0].mxu0
        %v1134 = vadd.f32 %v320, %v1133
        %v1135 = vpop.f32.mrb[0].mxu0
        %v1136 = vadd.f32 %v320, %v1135
        %1137 = vdwg.mxu0
        %1138 = vmatprep.subr.mxu0 %v261
        %1139 = vmatpush1.msra.mxu0 %v260
        %1140 = vmatprep.subr.mxu0 %v279
        %1141 = vmatpush1.msra.mxu0 %v278
        %1142 = vmatprep.subr.mxu0 0.0
        %1143 = vmatpush1.msra.mxu0 0.0
        %1144 = vmatprep.subr.mxu0 0.0
        %1145 = vmatpush1.msra.mxu0 0.0
        %1146 = vmatprep.subr.mxu0 0.0
        %1147 = vmatpush1.msra.mxu0 0.0
        %1148 = vmatprep.subr.mxu0 0.0
        %1149 = vmatpush1.msra.mxu0 0.0
        %1150 = vmatprep.subr.mxu0 0.0
        %1151 = vmatpush1.msra.mxu0 0.0
        %1152 = vmatprep.subr.mxu0 0.0
        %1153 = vmatpush1.msra.mxu0 0.0
        %1154 = vmatprep.subr.mxu0 0.0
        %1155 = vmatpush1.msra.mxu0 0.0
        %1156 = vmatprep.subr.mxu0 0.0
        %1157 = vmatpush1.msra.mxu0 0.0
        %1158 = vmatprep.subr.mxu0 0.0
        %1159 = vmatpush1.msra.mxu0 0.0
        %1160 = vmatprep.subr.mxu0 0.0
        %1161 = vmatpush1.msra.mxu0 0.0
        %1162 = vmatprep.subr.mxu0 0.0
        %1163 = vmatpush1.msra.mxu0 0.0
        %1164 = vmatprep.subr.mxu0 0.0
        %1165 = vmatpush1.msra.mxu0 0.0
        %1166 = vmatprep.subr.mxu0 0.0
        %1167 = vmatpush1.msra.mxu0 0.0
        %1168 = vmatprep.subr.mxu0 0.0
        %1169 = vmatpush1.msra.mxu0 0.0
        %1170 = vmatprep.subr.mxu0 0.0
        %1171 = vmatpush1.msra.mxu0 0.0
        %1172 = vmatprep.subr.mxu0 0.0
        %1173 = vmatpush1.msra.mxu0 0.0
        %1174 = vmatprep.subr.mxu0 0.0
        %1175 = vmatpush1.msra.mxu0 0.0
        %1176 = vmatprep.subr.mxu0 0.0
        %1177 = vmatpush1.msra.mxu0 0.0
        %1178 = vmatprep.subr.mxu0 0.0
        %1179 = vmatpush1.msra.mxu0 0.0
        %1180 = vmatprep.subr.mxu0 0.0
        %1181 = vmatpush1.msra.mxu0 0.0
        %1182 = vmatprep.subr.mxu0 0.0
        %1183 = vmatpush1.msra.mxu0 0.0
        %1184 = vmatprep.subr.mxu0 0.0
        %1185 = vmatpush1.msra.mxu0 0.0
        %1186 = vmatprep.subr.mxu0 0.0
        %1187 = vmatpush1.msra.mxu0 0.0
        %1188 = vmatprep.subr.mxu0 0.0
        %1189 = vmatpush1.msra.mxu0 0.0
        %1190 = vmatprep.subr.mxu0 0.0
        %1191 = vmatpush1.msra.mxu0 0.0
        %1192 = vmatprep.subr.mxu0 0.0
        %1193 = vmatpush1.msra.mxu0 0.0
        %1194 = vmatprep.subr.mxu0 0.0
        %1195 = vmatpush1.msra.mxu0 0.0
        %1196 = vmatprep.subr.mxu0 0.0
        %1197 = vmatpush1.msra.mxu0 0.0
        %1198 = vmatprep.subr.mxu0 0.0
        %1199 = vmatpush1.msra.mxu0 0.0
        %1200 = vmatprep.subr.mxu0 0.0
        %1201 = vmatpush1.msra.mxu0 0.0
        %1202 = vmatprep.mubr.f32.mxu0 0.0
        %1203 = vmatmul.mubr.f32.gmra.mrb[0].mxu0 %v324
        %v1204 = vpop.f32.mrb[0].mxu0
        %v1205 = vadd.f32 %v285, %v1204
        %v1206 = vpop.f32.mrb[0].mxu0
        %v1207 = vadd.f32 %v285, %v1206
        %1208 = vmatprep.mubr.f32.mxu0 0.0
        %1209 = vmatmul.mubr.f32.gmra.mrb[0].mxu0 %v327
        %v1210 = vpop.f32.mrb[0].mxu0
        %v1211 = vadd.f32 %v290, %v1210
        %v1212 = vpop.f32.mrb[0].mxu0
        %v1213 = vadd.f32 %v290, %v1212
        %1214 = vmatprep.mubr.f32.mxu0 0.0
        %1215 = vmatmul.mubr.f32.gmra.mrb[0].mxu0 %v330
        %v1216 = vpop.f32.mrb[0].mxu0
        %v1217 = vadd.f32 %v295, %v1216
        %v1218 = vpop.f32.mrb[0].mxu0
        %v1219 = vadd.f32 %v295, %v1218
        %1220 = vmatprep.mubr.f32.mxu0 0.0
        %1221 = vmatmul.mubr.f32.gmra.mrb[0].mxu0 %v333
        %v1222 = vpop.f32.mrb[0].mxu0
        %v1223 = vadd.f32 %v300, %v1222
        %v1224 = vpop.f32.mrb[0].mxu0
        %v1225 = vadd.f32 %v300, %v1224
        %1226 = vmatprep.mubr.f32.mxu0 0.0
        %1227 = vmatmul.mubr.f32.gmra.mrb[0].mxu0 %v336
        %v1228 = vpop.f32.mrb[0].mxu0
        %v1229 = vadd.f32 %v305, %v1228
        %v1230 = vpop.f32.mrb[0].mxu0
        %v1231 = vadd.f32 %v305, %v1230
        %1232 = vmatprep.mubr.f32.mxu0 0.0
        %1233 = vmatmul.mubr.f32.gmra.mrb[0].mxu0 %v339
        %v1234 = vpop.f32.mrb[0].mxu0
        %v1235 = vadd.f32 %v310, %v1234
        %v1236 = vpop.f32.mrb[0].mxu0
        %v1237 = vadd.f32 %v310, %v1236
        %1238 = vmatprep.mubr.f32.mxu0 0.0
        %1239 = vmatmul.mubr.f32.gmra.mrb[0].mxu0 %v342
        %v1240 = vpop.f32.mrb[0].mxu0
        %v1241 = vadd.f32 %v315, %v1240
        %v1242 = vpop.f32.mrb[0].mxu0
        %v1243 = vadd.f32 %v315, %v1242
        %1244 = vmatprep.mubr.f32.mxu0 0.0
        %1245 = vmatmul.mubr.f32.gmra.mrb[0].mxu0 %v345
        %v1246 = vpop.f32.mrb[0].mxu0
        %v1247 = vadd.f32 %v320, %v1246
        %v1248 = vpop.f32.mrb[0].mxu0
        %v1249 = vadd.f32 %v320, %v1248
        %1250 = vdwg.mxu0
        %1251 = vmatprep.subr.mxu0 %v263
        %1252 = vmatpush1.msra.mxu0 %v262
        %1253 = vmatprep.subr.mxu0 %v281
        %1254 = vmatpush1.msra.mxu0 %v280
        %1255 = vmatprep.subr.mxu0 0.0
        %1256 = vmatpush1.msra.mxu0 0.0
        %1257 = vmatprep.subr.mxu0 0.0
        %1258 = vmatpush1.msra.mxu0 0.0
        %1259 = vmatprep.subr.mxu0 0.0
        %1260 = vmatpush1.msra.mxu0 0.0
        %1261 = vmatprep.subr.mxu0 0.0
        %1262 = vmatpush1.msra.mxu0 0.0
        %1263 = vmatprep.subr.mxu0 0.0
        %1264 = vmatpush1.msra.mxu0 0.0
        %1265 = vmatprep.subr.mxu0 0.0
        %1266 = vmatpush1.msra.mxu0 0.0
        %1267 = vmatprep.subr.mxu0 0.0
        %1268 = vmatpush1.msra.mxu0 0.0
        %1269 = vmatprep.subr.mxu0 0.0
        %1270 = vmatpush1.msra.mxu0 0.0
        %1271 = vmatprep.subr.mxu0 0.0
        %1272 = vmatpush1.msra.mxu0 0.0
        %1273 = vmatprep.subr.mxu0 0.0
        %1274 = vmatpush1.msra.mxu0 0.0
        %1275 = vmatprep.subr.mxu0 0.0
        %1276 = vmatpush1.msra.mxu0 0.0
        %1277 = vmatprep.subr.mxu0 0.0
        %1278 = vmatpush1.msra.mxu0 0.0
        %1279 = vmatprep.subr.mxu0 0.0
        %1280 = vmatpush1.msra.mxu0 0.0
        %1281 = vmatprep.subr.mxu0 0.0
        %1282 = vmatpush1.msra.mxu0 0.0
        %1283 = vmatprep.subr.mxu0 0.0
        %1284 = vmatpush1.msra.mxu0 0.0
        %1285 = vmatprep.subr.mxu0 0.0
        %1286 = vmatpush1.msra.mxu0 0.0
        %1287 = vmatprep.subr.mxu0 0.0
        %1288 = vmatpush1.msra.mxu0 0.0
        %1289 = vmatprep.subr.mxu0 0.0
        %1290 = vmatpush1.msra.mxu0 0.0
        %1291 = vmatprep.subr.mxu0 0.0
        %1292 = vmatpush1.msra.mxu0 0.0
        %1293 = vmatprep.subr.mxu0 0.0
        %1294 = vmatpush1.msra.mxu0 0.0
        %1295 = vmatprep.subr.mxu0 0.0
        %1296 = vmatpush1.msra.mxu0 0.0
        %1297 = vmatprep.subr.mxu0 0.0
        %1298 = vmatpush1.msra.mxu0 0.0
        %1299 = vmatprep.subr.mxu0 0.0
        %1300 = vmatpush1.msra.mxu0 0.0
        %1301 = vmatprep.subr.mxu0 0.0
        %1302 = vmatpush1.msra.mxu0 0.0
        %1303 = vmatprep.subr.mxu0 0.0
        %1304 = vmatpush1.msra.mxu0 0.0
        %1305 = vmatprep.subr.mxu0 0.0
        %1306 = vmatpush1.msra.mxu0 0.0
        %1307 = vmatprep.subr.mxu0 0.0
        %1308 = vmatpush1.msra.mxu0 0.0
        %1309 = vmatprep.subr.mxu0 0.0
        %1310 = vmatpush1.msra.mxu0 0.0
        %1311 = vmatprep.subr.mxu0 0.0
        %1312 = vmatpush1.msra.mxu0 0.0
        %1313 = vmatprep.subr.mxu0 0.0
        %1314 = vmatpush1.msra.mxu0 0.0
        %1315 = vmatprep.mubr.f32.mxu0 0.0
        %1316 = vmatmul.mubr.f32.gmra.mrb[0].mxu0 %v324
        %v1317 = vpop.f32.mrb[0].mxu0
        %v1318 = vadd.f32 %v285, %v1317
        %v1319 = vpop.f32.mrb[0].mxu0
        %v1320 = vadd.f32 %v285, %v1319
        %1321 = vmatprep.mubr.f32.mxu0 0.0
        %1322 = vmatmul.mubr.f32.gmra.mrb[0].mxu0 %v327
        %v1323 = vpop.f32.mrb[0].mxu0
        %v1324 = vadd.f32 %v290, %v1323
        %v1325 = vpop.f32.mrb[0].mxu0
        %v1326 = vadd.f32 %v290, %v1325
        %1327 = vmatprep.mubr.f32.mxu0 0.0
        %1328 = vmatmul.mubr.f32.gmra.mrb[0].mxu0 %v330
        %v1329 = vpop.f32.mrb[0].mxu0
        %v1330 = vadd.f32 %v295, %v1329
        %v1331 = vpop.f32.mrb[0].mxu0
        %v1332 = vadd.f32 %v295, %v1331
        %1333 = vmatprep.mubr.f32.mxu0 0.0
        %1334 = vmatmul.mubr.f32.gmra.mrb[0].mxu0 %v333
        %v1335 = vpop.f32.mrb[0].mxu0
        %v1336 = vadd.f32 %v300, %v1335
        %v1337 = vpop.f32.mrb[0].mxu0
        %v1338 = vadd.f32 %v300, %v1337
        %1339 = vmatprep.mubr.f32.mxu0 0.0
        %1340 = vmatmul.mubr.f32.gmra.mrb[0].mxu0 %v336
        %v1341 = vpop.f32.mrb[0].mxu0
        %v1342 = vadd.f32 %v305, %v1341
        %v1343 = vpop.f32.mrb[0].mxu0
        %v1344 = vadd.f32 %v305, %v1343
        %1345 = vmatprep.mubr.f32.mxu0 0.0
        %1346 = vmatmul.mubr.f32.gmra.mrb[0].mxu0 %v339
        %v1347 = vpop.f32.mrb[0].mxu0
        %v1348 = vadd.f32 %v310, %v1347
        %v1349 = vpop.f32.mrb[0].mxu0
        %v1350 = vadd.f32 %v310, %v1349
        %1351 = vmatprep.mubr.f32.mxu0 0.0
        %1352 = vmatmul.mubr.f32.gmra.mrb[0].mxu0 %v342
        %v1353 = vpop.f32.mrb[0].mxu0
        %v1354 = vadd.f32 %v315, %v1353
        %v1355 = vpop.f32.mrb[0].mxu0
        %v1356 = vadd.f32 %v315, %v1355
        %1357 = vmatprep.mubr.f32.mxu0 0.0
        %1358 = vmatmul.mubr.f32.gmra.mrb[0].mxu0 %v345
        %v1359 = vpop.f32.mrb[0].mxu0
        %v1360 = vadd.f32 %v320, %v1359
        %v1361 = vpop.f32.mrb[0].mxu0
        %v1362 = vadd.f32 %v320, %v1361
        %1363 = vdwg.mxu0
        %v1364 = vmax.f32 %v414, 0.0
        %v1365 = vmax.f32 %v416, 0.0
        %v1366 = vmax.f32 %v527, 0.0
        %v1367 = vmax.f32 %v529, 0.0
        %v1368 = vmax.f32 %v640, 0.0
        %v1369 = vmax.f32 %v642, 0.0
        %v1370 = vmax.f32 %v753, 0.0
        %v1371 = vmax.f32 %v755, 0.0
        %v1372 = vmax.f32 %v866, 0.0
        %v1373 = vmax.f32 %v868, 0.0
        %v1374 = vmax.f32 %v979, 0.0
        %v1375 = vmax.f32 %v981, 0.0
        %v1376 = vmax.f32 %v1092, 0.0
        %v1377 = vmax.f32 %v1094, 0.0
        %v1378 = vmax.f32 %v1205, 0.0
        %v1379 = vmax.f32 %v1207, 0.0
        %v1380 = vmax.f32 %v1318, 0.0
        %v1381 = vmax.f32 %v1320, 0.0
        %v1382 = vmax.f32 %v420, 0.0
        %v1383 = vmax.f32 %v422, 0.0
        %v1384 = vmax.f32 %v533, 0.0
        %v1385 = vmax.f32 %v535, 0.0
        %v1386 = vmax.f32 %v646, 0.0
        %v1387 = vmax.f32 %v648, 0.0
        %v1388 = vmax.f32 %v759, 0.0
        %v1389 = vmax.f32 %v761, 0.0
        %v1390 = vmax.f32 %v872, 0.0
        %v1391 = vmax.f32 %v874, 0.0
        %v1392 = vmax.f32 %v985, 0.0
        %v1393 = vmax.f32 %v987, 0.0
        %v1394 = vmax.f32 %v1098, 0.0
        %v1395 = vmax.f32 %v1100, 0.0
        %v1396 = vmax.f32 %v1211, 0.0
        %v1397 = vmax.f32 %v1213, 0.0
        %v1398 = vmax.f32 %v1324, 0.0
        %v1399 = vmax.f32 %v1326, 0.0
        %v1400 = vmax.f32 %v426, 0.0
        %v1401 = vmax.f32 %v428, 0.0
        %v1402 = vmax.f32 %v539, 0.0
        %v1403 = vmax.f32 %v541, 0.0
        %v1404 = vmax.f32 %v652, 0.0
        %v1405 = vmax.f32 %v654, 0.0
        %v1406 = vmax.f32 %v765, 0.0
        %v1407 = vmax.f32 %v767, 0.0
        %v1408 = vmax.f32 %v878, 0.0
        %v1409 = vmax.f32 %v880, 0.0
        %v1410 = vmax.f32 %v991, 0.0
        %v1411 = vmax.f32 %v993, 0.0
        %v1412 = vmax.f32 %v1104, 0.0
        %v1413 = vmax.f32 %v1106, 0.0
        %v1414 = vmax.f32 %v1217, 0.0
        %v1415 = vmax.f32 %v1219, 0.0
        %v1416 = vmax.f32 %v1330, 0.0
        %v1417 = vmax.f32 %v1332, 0.0
        %v1418 = vmax.f32 %v432, 0.0
        %v1419 = vmax.f32 %v434, 0.0
        %v1420 = vmax.f32 %v545, 0.0
        %v1421 = vmax.f32 %v547, 0.0
        %v1422 = vmax.f32 %v658, 0.0
        %v1423 = vmax.f32 %v660, 0.0
        %v1424 = vmax.f32 %v771, 0.0
        %v1425 = vmax.f32 %v773, 0.0
        %v1426 = vmax.f32 %v884, 0.0
        %v1427 = vmax.f32 %v886, 0.0
        %v1428 = vmax.f32 %v997, 0.0
        %v1429 = vmax.f32 %v999, 0.0
        %v1430 = vmax.f32 %v1110, 0.0
        %v1431 = vmax.f32 %v1112, 0.0
        %v1432 = vmax.f32 %v1223, 0.0
        %v1433 = vmax.f32 %v1225, 0.0
        %v1434 = vmax.f32 %v1336, 0.0
        %v1435 = vmax.f32 %v1338, 0.0
        %v1436 = vmax.f32 %v438, 0.0
        %v1437 = vmax.f32 %v440, 0.0
        %v1438 = vmax.f32 %v551, 0.0
        %v1439 = vmax.f32 %v553, 0.0
        %v1440 = vmax.f32 %v664, 0.0
        %v1441 = vmax.f32 %v666, 0.0
        %v1442 = vmax.f32 %v777, 0.0
        %v1443 = vmax.f32 %v779, 0.0
        %v1444 = vmax.f32 %v890, 0.0
        %v1445 = vmax.f32 %v892, 0.0
        %v1446 = vmax.f32 %v1003, 0.0
        %v1447 = vmax.f32 %v1005, 0.0
        %v1448 = vmax.f32 %v1116, 0.0
        %v1449 = vmax.f32 %v1118, 0.0
        %v1450 = vmax.f32 %v1229, 0.0
        %v1451 = vmax.f32 %v1231, 0.0
        %v1452 = vmax.f32 %v1342, 0.0
        %v1453 = vmax.f32 %v1344, 0.0
        %v1454 = vmax.f32 %v444, 0.0
        %v1455 = vmax.f32 %v446, 0.0
        %v1456 = vmax.f32 %v557, 0.0
        %v1457 = vmax.f32 %v559, 0.0
        %v1458 = vmax.f32 %v670, 0.0
        %v1459 = vmax.f32 %v672, 0.0
        %v1460 = vmax.f32 %v783, 0.0
        %v1461 = vmax.f32 %v785, 0.0
        %v1462 = vmax.f32 %v896, 0.0
        %v1463 = vmax.f32 %v898, 0.0
        %v1464 = vmax.f32 %v1009, 0.0
        %v1465 = vmax.f32 %v1011, 0.0
        %v1466 = vmax.f32 %v1122, 0.0
        %v1467 = vmax.f32 %v1124, 0.0
        %v1468 = vmax.f32 %v1235, 0.0
        %v1469 = vmax.f32 %v1237, 0.0
        %v1470 = vmax.f32 %v1348, 0.0
        %v1471 = vmax.f32 %v1350, 0.0
        %v1472 = vmax.f32 %v450, 0.0
        %v1473 = vmax.f32 %v452, 0.0
        %v1474 = vmax.f32 %v563, 0.0
        %v1475 = vmax.f32 %v565, 0.0
        %v1476 = vmax.f32 %v676, 0.0
        %v1477 = vmax.f32 %v678, 0.0
        %v1478 = vmax.f32 %v789, 0.0
        %v1479 = vmax.f32 %v791, 0.0
        %v1480 = vmax.f32 %v902, 0.0
        %v1481 = vmax.f32 %v904, 0.0
        %v1482 = vmax.f32 %v1015, 0.0
        %v1483 = vmax.f32 %v1017, 0.0
        %v1484 = vmax.f32 %v1128, 0.0
        %v1485 = vmax.f32 %v1130, 0.0
        %v1486 = vmax.f32 %v1241, 0.0
        %v1487 = vmax.f32 %v1243, 0.0
        %v1488 = vmax.f32 %v1354, 0.0
        %v1489 = vmax.f32 %v1356, 0.0
        %v1490 = vmax.f32 %v456, 0.0
        %v1491 = vmax.f32 %v458, 0.0
        %v1492 = vmax.f32 %v569, 0.0
        %v1493 = vmax.f32 %v571, 0.0
        %v1494 = vmax.f32 %v682, 0.0
        %v1495 = vmax.f32 %v684, 0.0
        %v1496 = vmax.f32 %v795, 0.0
        %v1497 = vmax.f32 %v797, 0.0
        %v1498 = vmax.f32 %v908, 0.0
        %v1499 = vmax.f32 %v910, 0.0
        %v1500 = vmax.f32 %v1021, 0.0
        %v1501 = vmax.f32 %v1023, 0.0
        %v1502 = vmax.f32 %v1134, 0.0
        %v1503 = vmax.f32 %v1136, 0.0
        %v1504 = vmax.f32 %v1247, 0.0
        %v1505 = vmax.f32 %v1249, 0.0
        %v1506 = vmax.f32 %v1360, 0.0
        %v1507 = vmax.f32 %v1362, 0.0
        %1508 = vst [vmem:[#allocation2] sm:$0xff] %v1364
        %1509 = vst [vmem:[#allocation2 + $0x8] sm:$0xff] %v1365
        %1510 = vst [vmem:[#allocation2 + $0x10] sm:$0xff] %v1382
        %1511 = vst [vmem:[#allocation2 + $0x18] sm:$0xff] %v1383
        %1512 = vst [vmem:[#allocation2 + $0x20] sm:$0xff] %v1400
        %1513 = vst [vmem:[#allocation2 + $0x28] sm:$0xff] %v1401
        %1514 = vst [vmem:[#allocation2 + $0x30] sm:$0xff] %v1418
        %1515 = vst [vmem:[#allocation2 + $0x38] sm:$0xff] %v1419
        %1516 = vst [vmem:[#allocation2 + $0x40] sm:$0xff] %v1436
        %1517 = vst [vmem:[#allocation2 + $0x48] sm:$0xff] %v1437
        %1518 = vst [vmem:[#allocation2 + $0x50] sm:$0xff] %v1454
        %1519 = vst [vmem:[#allocation2 + $0x58] sm:$0xff] %v1455
        %1520 = vst [vmem:[#allocation2 + $0x60] sm:$0xff] %v1472
        %1521 = vst [vmem:[#allocation2 + $0x68] sm:$0xff] %v1473
        %1522 = vst [vmem:[#allocation2 + $0x70] sm:$0xff] %v1490
        %1523 = vst [vmem:[#allocation2 + $0x78] sm:$0xff] %v1491
        %1524 = vst [vmem:[#allocation2 + $0x80] sm:$0xff] %v1366
        %1525 = vst [vmem:[#allocation2 + $0x88] sm:$0xff] %v1367
        %1526 = vst [vmem:[#allocation2 + $0x90] sm:$0xff] %v1384
        %1527 = vst [vmem:[#allocation2 + $0x98] sm:$0xff] %v1385
        %1528 = vst [vmem:[#allocation2 + $0xa0] sm:$0xff] %v1402
        %1529 = vst [vmem:[#allocation2 + $0xa8] sm:$0xff] %v1403
        %1530 = vst [vmem:[#allocation2 + $0xb0] sm:$0xff] %v1420
        %1531 = vst [vmem:[#allocation2 + $0xb8] sm:$0xff] %v1421
        %1532 = vst [vmem:[#allocation2 + $0xc0] sm:$0xff] %v1438
        %1533 = vst [vmem:[#allocation2 + $0xc8] sm:$0xff] %v1439
        %1534 = vst [vmem:[#allocation2 + $0xd0] sm:$0xff] %v1456
        %1535 = vst [vmem:[#allocation2 + $0xd8] sm:$0xff] %v1457
        %1536 = vst [vmem:[#allocation2 + $0xe0] sm:$0xff] %v1474
        %1537 = vst [vmem:[#allocation2 + $0xe8] sm:$0xff] %v1475
        %1538 = vst [vmem:[#allocation2 + $0xf0] sm:$0xff] %v1492
        %1539 = vst [vmem:[#allocation2 + $0xf8] sm:$0xff] %v1493
        %1540 = vst [vmem:[#allocation2 + $0x100] sm:$0xff] %v1368
        %1541 = vst [vmem:[#allocation2 + $0x108] sm:$0xff] %v1369
        %1542 = vst [vmem:[#allocation2 + $0x110] sm:$0xff] %v1386
        %1543 = vst [vmem:[#allocation2 + $0x118] sm:$0xff] %v1387
        %1544 = vst [vmem:[#allocation2 + $0x120] sm:$0xff] %v1404
        %1545 = vst [vmem:[#allocation2 + $0x128] sm:$0xff] %v1405
        %1546 = vst [vmem:[#allocation2 + $0x130] sm:$0xff] %v1422
        %1547 = vst [vmem:[#allocation2 + $0x138] sm:$0xff] %v1423
        %1548 = vst [vmem:[#allocation2 + $0x140] sm:$0xff] %v1440
        %1549 = vst [vmem:[#allocation2 + $0x148] sm:$0xff] %v1441
        %1550 = vst [vmem:[#allocation2 + $0x150] sm:$0xff] %v1458
        %1551 = vst [vmem:[#allocation2 + $0x158] sm:$0xff] %v1459
        %1552 = vst [vmem:[#allocation2 + $0x160] sm:$0xff] %v1476
        %1553 = vst [vmem:[#allocation2 + $0x168] sm:$0xff] %v1477
        %1554 = vst [vmem:[#allocation2 + $0x170] sm:$0xff] %v1494
        %1555 = vst [vmem:[#allocation2 + $0x178] sm:$0xff] %v1495
        %1556 = vst [vmem:[#allocation2 + $0x180] sm:$0xff] %v1370
        %1557 = vst [vmem:[#allocation2 + $0x188] sm:$0xff] %v1371
        %1558 = vst [vmem:[#allocation2 + $0x190] sm:$0xff] %v1388
        %1559 = vst [vmem:[#allocation2 + $0x198] sm:$0xff] %v1389
        %1560 = vst [vmem:[#allocation2 + $0x1a0] sm:$0xff] %v1406
        %1561 = vst [vmem:[#allocation2 + $0x1a8] sm:$0xff] %v1407
        %1562 = vst [vmem:[#allocation2 + $0x1b0] sm:$0xff] %v1424
        %1563 = vst [vmem:[#allocation2 + $0x1b8] sm:$0xff] %v1425
        %1564 = vst [vmem:[#allocation2 + $0x1c0] sm:$0xff] %v1442
        %1565 = vst [vmem:[#allocation2 + $0x1c8] sm:$0xff] %v1443
        %1566 = vst [vmem:[#allocation2 + $0x1d0] sm:$0xff] %v1460
        %1567 = vst [vmem:[#allocation2 + $0x1d8] sm:$0xff] %v1461
        %1568 = vst [vmem:[#allocation2 + $0x1e0] sm:$0xff] %v1478
        %1569 = vst [vmem:[#allocation2 + $0x1e8] sm:$0xff] %v1479
        %1570 = vst [vmem:[#allocation2 + $0x1f0] sm:$0xff] %v1496
        %1571 = vst [vmem:[#allocation2 + $0x1f8] sm:$0xff] %v1497
        %1572 = vst [vmem:[#allocation2 + $0x200] sm:$0xff] %v1372
        %1573 = vst [vmem:[#allocation2 + $0x208] sm:$0xff] %v1373
        %1574 = vst [vmem:[#allocation2 + $0x210] sm:$0xff] %v1390
        %1575 = vst [vmem:[#allocation2 + $0x218] sm:$0xff] %v1391
        %1576 = vst [vmem:[#allocation2 + $0x220] sm:$0xff] %v1408
        %1577 = vst [vmem:[#allocation2 + $0x228] sm:$0xff] %v1409
        %1578 = vst [vmem:[#allocation2 + $0x230] sm:$0xff] %v1426
        %1579 = vst [vmem:[#allocation2 + $0x238] sm:$0xff] %v1427
        %1580 = vst [vmem:[#allocation2 + $0x240] sm:$0xff] %v1444
        %1581 = vst [vmem:[#allocation2 + $0x248] sm:$0xff] %v1445
        %1582 = vst [vmem:[#allocation2 + $0x250] sm:$0xff] %v1462
        %1583 = vst [vmem:[#allocation2 + $0x258] sm:$0xff] %v1463
        %1584 = vst [vmem:[#allocation2 + $0x260] sm:$0xff] %v1480
        %1585 = vst [vmem:[#allocation2 + $0x268] sm:$0xff] %v1481
        %1586 = vst [vmem:[#allocation2 + $0x270] sm:$0xff] %v1498
        %1587 = vst [vmem:[#allocation2 + $0x278] sm:$0xff] %v1499
        %1588 = vst [vmem:[#allocation2 + $0x280] sm:$0xff] %v1374
        %1589 = vst [vmem:[#allocation2 + $0x288] sm:$0xff] %v1375
        %1590 = vst [vmem:[#allocation2 + $0x290] sm:$0xff] %v1392
        %1591 = vst [vmem:[#allocation2 + $0x298] sm:$0xff] %v1393
        %1592 = vst [vmem:[#allocation2 + $0x2a0] sm:$0xff] %v1410
        %1593 = vst [vmem:[#allocation2 + $0x2a8] sm:$0xff] %v1411
        %1594 = vst [vmem:[#allocation2 + $0x2b0] sm:$0xff] %v1428
        %1595 = vst [vmem:[#allocation2 + $0x2b8] sm:$0xff] %v1429
        %1596 = vst [vmem:[#allocation2 + $0x2c0] sm:$0xff] %v1446
        %1597 = vst [vmem:[#allocation2 + $0x2c8] sm:$0xff] %v1447
        %1598 = vst [vmem:[#allocation2 + $0x2d0] sm:$0xff] %v1464
        %1599 = vst [vmem:[#allocation2 + $0x2d8] sm:$0xff] %v1465
        %1600 = vst [vmem:[#allocation2 + $0x2e0] sm:$0xff] %v1482
        %1601 = vst [vmem:[#allocation2 + $0x2e8] sm:$0xff] %v1483
        %1602 = vst [vmem:[#allocation2 + $0x2f0] sm:$0xff] %v1500
        %1603 = vst [vmem:[#allocation2 + $0x2f8] sm:$0xff] %v1501
        %1604 = vst [vmem:[#allocation2 + $0x300] sm:$0xff] %v1376
        %1605 = vst [vmem:[#allocation2 + $0x308] sm:$0xff] %v1377
        %1606 = vst [vmem:[#allocation2 + $0x310] sm:$0xff] %v1394
        %1607 = vst [vmem:[#allocation2 + $0x318] sm:$0xff] %v1395
        %1608 = vst [vmem:[#allocation2 + $0x320] sm:$0xff] %v1412
        %1609 = vst [vmem:[#allocation2 + $0x328] sm:$0xff] %v1413
        %1610 = vst [vmem:[#allocation2 + $0x330] sm:$0xff] %v1430
        %1611 = vst [vmem:[#allocation2 + $0x338] sm:$0xff] %v1431
        %1612 = vst [vmem:[#allocation2 + $0x340] sm:$0xff] %v1448
        %1613 = vst [vmem:[#allocation2 + $0x348] sm:$0xff] %v1449
        %1614 = vst [vmem:[#allocation2 + $0x350] sm:$0xff] %v1466
        %1615 = vst [vmem:[#allocation2 + $0x358] sm:$0xff] %v1467
        %1616 = vst [vmem:[#allocation2 + $0x360] sm:$0xff] %v1484
        %1617 = vst [vmem:[#allocation2 + $0x368] sm:$0xff] %v1485
        %1618 = vst [vmem:[#allocation2 + $0x370] sm:$0xff] %v1502
        %1619 = vst [vmem:[#allocation2 + $0x378] sm:$0xff] %v1503
        %1620 = vst [vmem:[#allocation2 + $0x380] sm:$0xff] %v1378
        %1621 = vst [vmem:[#allocation2 + $0x388] sm:$0xff] %v1379
        %1622 = vst [vmem:[#allocation2 + $0x390] sm:$0xff] %v1396
        %1623 = vst [vmem:[#allocation2 + $0x398] sm:$0xff] %v1397
        %1624 = vst [vmem:[#allocation2 + $0x3a0] sm:$0xff] %v1414
        %1625 = vst [vmem:[#allocation2 + $0x3a8] sm:$0xff] %v1415
        %1626 = vst [vmem:[#allocation2 + $0x3b0] sm:$0xff] %v1432
        %1627 = vst [vmem:[#allocation2 + $0x3b8] sm:$0xff] %v1433
        %1628 = vst [vmem:[#allocation2 + $0x3c0] sm:$0xff] %v1450
        %1629 = vst [vmem:[#allocation2 + $0x3c8] sm:$0xff] %v1451
        %1630 = vst [vmem:[#allocation2 + $0x3d0] sm:$0xff] %v1468
        %1631 = vst [vmem:[#allocation2 + $0x3d8] sm:$0xff] %v1469
        %1632 = vst [vmem:[#allocation2 + $0x3e0] sm:$0xff] %v1486
        %1633 = vst [vmem:[#allocation2 + $0x3e8] sm:$0xff] %v1487
        %1634 = vst [vmem:[#allocation2 + $0x3f0] sm:$0xff] %v1504
        %1635 = vst [vmem:[#allocation2 + $0x3f8] sm:$0xff] %v1505
        %1636 = vst [vmem:[#allocation2 + $0x400] sm:$0xff] %v1380
        %1637 = vst [vmem:[#allocation2 + $0x408] sm:$0xff] %v1381
        %1638 = vst [vmem:[#allocation2 + $0x410] sm:$0xff] %v1398
        %1639 = vst [vmem:[#allocation2 + $0x418] sm:$0xff] %v1399
        %1640 = vst [vmem:[#allocation2 + $0x420] sm:$0xff] %v1416
        %1641 = vst [vmem:[#allocation2 + $0x428] sm:$0xff] %v1417
        %1642 = vst [vmem:[#allocation2 + $0x430] sm:$0xff] %v1434
        %1643 = vst [vmem:[#allocation2 + $0x438] sm:$0xff] %v1435
        %1644 = vst [vmem:[#allocation2 + $0x440] sm:$0xff] %v1452
        %1645 = vst [vmem:[#allocation2 + $0x448] sm:$0xff] %v1453
        %1646 = vst [vmem:[#allocation2 + $0x450] sm:$0xff] %v1470
        %1647 = vst [vmem:[#allocation2 + $0x458] sm:$0xff] %v1471
        %1648 = vst [vmem:[#allocation2 + $0x460] sm:$0xff] %v1488
        %1649 = vst [vmem:[#allocation2 + $0x468] sm:$0xff] %v1489
        %1650 = vst [vmem:[#allocation2 + $0x470] sm:$0xff] %v1506
        %1651 = vst [vmem:[#allocation2 + $0x478] sm:$0xff] %v1507
        %v1652 = vld [vmem:[%s2] sm:$0xff]
        %v1653 = vld [vmem:[%s2 + $0x8] sm:$0xff]
        %v1654 = vld [vmem:[%s2 + $0x10] sm:$0xff]
        %v1655 = vld [vmem:[%s2 + $0x18] sm:$0xff]
        %v1656 = vld [vmem:[%s2 + $0x20] sm:$0xff]
        %v1657 = vld [vmem:[%s2 + $0x28] sm:$0xff]
        %v1658 = vld [vmem:[%s2 + $0x30] sm:$0xff]
        %v1659 = vld [vmem:[%s2 + $0x38] sm:$0xff]
        %v1660 = vld [vmem:[%s2 + $0x40] sm:$0xff]
        %v1661 = vld [vmem:[%s2 + $0x48] sm:$0xff]
        %v1662 = vld [vmem:[%s2 + $0x50] sm:$0xff]
        %v1663 = vld [vmem:[%s2 + $0x58] sm:$0xff]
        %v1664 = vld [vmem:[%s2 + $0x60] sm:$0xff]
        %v1665 = vld [vmem:[%s2 + $0x68] sm:$0xff]
        %v1666 = vld [vmem:[%s2 + $0x70] sm:$0xff]
        %v1667 = vld [vmem:[%s2 + $0x78] sm:$0xff]
        %v1668 = vld [vmem:[%s2 + $0x80] sm:$0xff]
        %v1669 = vld [vmem:[%s2 + $0x88] sm:$0xff]
        %v1670 = vld [vmem:[%s2 + $0x90] sm:$0xff]
        %v1671 = vld [vmem:[%s2 + $0x98] sm:$0xff]
        %v1672 = vld [vmem:[%s2 + $0xa0] sm:$0xff]
        %v1673 = vld [vmem:[%s2 + $0xa8] sm:$0xff]
        %v1674 = vld [vmem:[%s2 + $0xb0] sm:$0xff]
        %v1675 = vld [vmem:[%s2 + $0xb8] sm:$0xff]
        %v1676 = vld [vmem:[%s2 + $0xc0] sm:$0xff]
        %v1677 = vld [vmem:[%s2 + $0xc8] sm:$0xff]
        %v1678 = vld [vmem:[%s2 + $0xd0] sm:$0xff]
        %v1679 = vld [vmem:[%s2 + $0xd8] sm:$0xff]
        %v1680 = vld [vmem:[%s2 + $0xe0] sm:$0xff]
        %v1681 = vld [vmem:[%s2 + $0xe8] sm:$0xff]
        %v1682 = vld [vmem:[%s2 + $0xf0] sm:$0xff]
        %v1683 = vld [vmem:[%s2 + $0xf8] sm:$0xff]
        %v1684 = vld [vmem:[%s2 + $0x100] sm:$0xff]
        %v1685 = vld [vmem:[%s2 + $0x108] sm:$0xff]
        %v1686 = vld [vmem:[%s2 + $0x110] sm:$0xff]
        %v1687 = vld [vmem:[%s2 + $0x118] sm:$0xff]
        %v1688 = vld [vmem:[%s2 + $0x120] sm:$0xff]
        %v1689 = vld [vmem:[%s2 + $0x128] sm:$0xff]
        %v1690 = vld [vmem:[%s2 + $0x130] sm:$0xff]
        %v1691 = vld [vmem:[%s2 + $0x138] sm:$0xff]
        %v1692 = vld [vmem:[#allocation2] sm:$0xff]
        %v1693 = vld [vmem:[#allocation2 + $0x8] sm:$0xff]
        %v1694 = vld [vmem:[#allocation2 + $0x10] sm:$0xff]
        %v1695 = vld [vmem:[#allocation2 + $0x18] sm:$0xff]
        %v1696 = vld [vmem:[#allocation2 + $0x20] sm:$0xff]
        %v1697 = vld [vmem:[#allocation2 + $0x28] sm:$0xff]
        %v1698 = vld [vmem:[#allocation2 + $0x30] sm:$0xff]
        %v1699 = vld [vmem:[#allocation2 + $0x38] sm:$0xff]
        %v1700 = vld [vmem:[#allocation2 + $0x40] sm:$0xff]
        %v1701 = vld [vmem:[#allocation2 + $0x48] sm:$0xff]
        %v1702 = vld [vmem:[#allocation2 + $0x50] sm:$0xff]
        %v1703 = vld [vmem:[#allocation2 + $0x58] sm:$0xff]
        %v1704 = vld [vmem:[#allocation2 + $0x60] sm:$0xff]
        %v1705 = vld [vmem:[#allocation2 + $0x68] sm:$0xff]
        %v1706 = vld [vmem:[#allocation2 + $0x70] sm:$0xff]
        %v1707 = vld [vmem:[#allocation2 + $0x78] sm:$0xff]
        %v1708 = vld [vmem:[#allocation2 + $0x80] sm:$0xff]
        %v1709 = vld [vmem:[#allocation2 + $0x88] sm:$0xff]
        %v1710 = vld [vmem:[#allocation2 + $0x90] sm:$0xff]
        %v1711 = vld [vmem:[#allocation2 + $0x98] sm:$0xff]
        %v1712 = vld [vmem:[#allocation2 + $0xa0] sm:$0xff]
        %v1713 = vld [vmem:[#allocation2 + $0xa8] sm:$0xff]
        %v1714 = vld [vmem:[#allocation2 + $0xb0] sm:$0xff]
        %v1715 = vld [vmem:[#allocation2 + $0xb8] sm:$0xff]
        %v1716 = vld [vmem:[#allocation2 + $0xc0] sm:$0xff]
        %v1717 = vld [vmem:[#allocation2 + $0xc8] sm:$0xff]
        %v1718 = vld [vmem:[#allocation2 + $0xd0] sm:$0xff]
        %v1719 = vld [vmem:[#allocation2 + $0xd8] sm:$0xff]
        %v1720 = vld [vmem:[#allocation2 + $0xe0] sm:$0xff]
        %v1721 = vld [vmem:[#allocation2 + $0xe8] sm:$0xff]
        %v1722 = vld [vmem:[#allocation2 + $0xf0] sm:$0xff]
        %v1723 = vld [vmem:[#allocation2 + $0xf8] sm:$0xff]
        %v1724 = vld [vmem:[#allocation2 + $0x100] sm:$0xff]
        %v1725 = vld [vmem:[#allocation2 + $0x108] sm:$0xff]
        %v1726 = vld [vmem:[#allocation2 + $0x110] sm:$0xff]
        %v1727 = vld [vmem:[#allocation2 + $0x118] sm:$0xff]
        %v1728 = vld [vmem:[#allocation2 + $0x120] sm:$0xff]
        %v1729 = vld [vmem:[#allocation2 + $0x128] sm:$0xff]
        %v1730 = vld [vmem:[#allocation2 + $0x130] sm:$0xff]
        %v1731 = vld [vmem:[#allocation2 + $0x138] sm:$0xff]
        %v1732 = vld [vmem:[#allocation2 + $0x140] sm:$0xff]
        %v1733 = vld [vmem:[#allocation2 + $0x148] sm:$0xff]
        %v1734 = vld [vmem:[#allocation2 + $0x150] sm:$0xff]
        %v1735 = vld [vmem:[#allocation2 + $0x158] sm:$0xff]
        %v1736 = vld [vmem:[#allocation2 + $0x160] sm:$0xff]
        %v1737 = vld [vmem:[#allocation2 + $0x168] sm:$0xff]
        %v1738 = vld [vmem:[#allocation2 + $0x170] sm:$0xff]
        %v1739 = vld [vmem:[#allocation2 + $0x178] sm:$0xff]
        %v1740 = vld [vmem:[#allocation2 + $0x180] sm:$0xff]
        %v1741 = vld [vmem:[#allocation2 + $0x188] sm:$0xff]
        %v1742 = vld [vmem:[#allocation2 + $0x190] sm:$0xff]
        %v1743 = vld [vmem:[#allocation2 + $0x198] sm:$0xff]
        %v1744 = vld [vmem:[#allocation2 + $0x1a0] sm:$0xff]
        %v1745 = vld [vmem:[#allocation2 + $0x1a8] sm:$0xff]
        %v1746 = vld [vmem:[#allocation2 + $0x1b0] sm:$0xff]
        %v1747 = vld [vmem:[#allocation2 + $0x1b8] sm:$0xff]
        %v1748 = vld [vmem:[#allocation2 + $0x1c0] sm:$0xff]
        %v1749 = vld [vmem:[#allocation2 + $0x1c8] sm:$0xff]
        %v1750 = vld [vmem:[#allocation2 + $0x1d0] sm:$0xff]
        %v1751 = vld [vmem:[#allocation2 + $0x1d8] sm:$0xff]
        %v1752 = vld [vmem:[#allocation2 + $0x1e0] sm:$0xff]
        %v1753 = vld [vmem:[#allocation2 + $0x1e8] sm:$0xff]
        %v1754 = vld [vmem:[#allocation2 + $0x1f0] sm:$0xff]
        %v1755 = vld [vmem:[#allocation2 + $0x1f8] sm:$0xff]
        %v1756 = vld [vmem:[#allocation2 + $0x200] sm:$0xff]
        %v1757 = vld [vmem:[#allocation2 + $0x208] sm:$0xff]
        %v1758 = vld [vmem:[#allocation2 + $0x210] sm:$0xff]
        %v1759 = vld [vmem:[#allocation2 + $0x218] sm:$0xff]
        %v1760 = vld [vmem:[#allocation2 + $0x220] sm:$0xff]
        %v1761 = vld [vmem:[#allocation2 + $0x228] sm:$0xff]
        %v1762 = vld [vmem:[#allocation2 + $0x230] sm:$0xff]
        %v1763 = vld [vmem:[#allocation2 + $0x238] sm:$0xff]
        %v1764 = vld [vmem:[#allocation2 + $0x240] sm:$0xff]
        %v1765 = vld [vmem:[#allocation2 + $0x248] sm:$0xff]
        %v1766 = vld [vmem:[#allocation2 + $0x250] sm:$0xff]
        %v1767 = vld [vmem:[#allocation2 + $0x258] sm:$0xff]
        %v1768 = vld [vmem:[#allocation2 + $0x260] sm:$0xff]
        %v1769 = vld [vmem:[#allocation2 + $0x268] sm:$0xff]
        %v1770 = vld [vmem:[#allocation2 + $0x270] sm:$0xff]
        %v1771 = vld [vmem:[#allocation2 + $0x278] sm:$0xff]
        %v1772 = vld [vmem:[#allocation2 + $0x280] sm:$0xff]
        %v1773 = vld [vmem:[#allocation2 + $0x288] sm:$0xff]
        %v1774 = vld [vmem:[#allocation2 + $0x290] sm:$0xff]
        %v1775 = vld [vmem:[#allocation2 + $0x298] sm:$0xff]
        %v1776 = vld [vmem:[#allocation2 + $0x2a0] sm:$0xff]
        %v1777 = vld [vmem:[#allocation2 + $0x2a8] sm:$0xff]
        %v1778 = vld [vmem:[#allocation2 + $0x2b0] sm:$0xff]
        %v1779 = vld [vmem:[#allocation2 + $0x2b8] sm:$0xff]
        %v1780 = vld [vmem:[#allocation2 + $0x2c0] sm:$0xff]
        %v1781 = vld [vmem:[#allocation2 + $0x2c8] sm:$0xff]
        %v1782 = vld [vmem:[#allocation2 + $0x2d0] sm:$0xff]
        %v1783 = vld [vmem:[#allocation2 + $0x2d8] sm:$0xff]
        %v1784 = vld [vmem:[#allocation2 + $0x2e0] sm:$0xff]
        %v1785 = vld [vmem:[#allocation2 + $0x2e8] sm:$0xff]
        %v1786 = vld [vmem:[#allocation2 + $0x2f0] sm:$0xff]
        %v1787 = vld [vmem:[#allocation2 + $0x2f8] sm:$0xff]
        %v1788 = vld [vmem:[#allocation2 + $0x300] sm:$0xff]
        %v1789 = vld [vmem:[#allocation2 + $0x308] sm:$0xff]
        %v1790 = vld [vmem:[#allocation2 + $0x310] sm:$0xff]
        %v1791 = vld [vmem:[#allocation2 + $0x318] sm:$0xff]
        %v1792 = vld [vmem:[#allocation2 + $0x320] sm:$0xff]
        %v1793 = vld [vmem:[#allocation2 + $0x328] sm:$0xff]
        %v1794 = vld [vmem:[#allocation2 + $0x330] sm:$0xff]
        %v1795 = vld [vmem:[#allocation2 + $0x338] sm:$0xff]
        %v1796 = vld [vmem:[#allocation2 + $0x340] sm:$0xff]
        %v1797 = vld [vmem:[#allocation2 + $0x348] sm:$0xff]
        %v1798 = vld [vmem:[#allocation2 + $0x350] sm:$0xff]
        %v1799 = vld [vmem:[#allocation2 + $0x358] sm:$0xff]
        %v1800 = vld [vmem:[#allocation2 + $0x360] sm:$0xff]
        %v1801 = vld [vmem:[#allocation2 + $0x368] sm:$0xff]
        %v1802 = vld [vmem:[#allocation2 + $0x370] sm:$0xff]
        %v1803 = vld [vmem:[#allocation2 + $0x378] sm:$0xff]
        %v1804 = vld [vmem:[#allocation2 + $0x380] sm:$0xff]
        %v1805 = vld [vmem:[#allocation2 + $0x388] sm:$0xff]
        %v1806 = vld [vmem:[#allocation2 + $0x390] sm:$0xff]
        %v1807 = vld [vmem:[#allocation2 + $0x398] sm:$0xff]
        %v1808 = vld [vmem:[#allocation2 + $0x3a0] sm:$0xff]
        %v1809 = vld [vmem:[#allocation2 + $0x3a8] sm:$0xff]
        %v1810 = vld [vmem:[#allocation2 + $0x3b0] sm:$0xff]
        %v1811 = vld [vmem:[#allocation2 + $0x3b8] sm:$0xff]
        %v1812 = vld [vmem:[#allocation2 + $0x3c0] sm:$0xff]
        %v1813 = vld [vmem:[#allocation2 + $0x3c8] sm:$0xff]
        %v1814 = vld [vmem:[#allocation2 + $0x3d0] sm:$0xff]
        %v1815 = vld [vmem:[#allocation2 + $0x3d8] sm:$0xff]
        %v1816 = vld [vmem:[#allocation2 + $0x3e0] sm:$0xff]
        %v1817 = vld [vmem:[#allocation2 + $0x3e8] sm:$0xff]
        %v1818 = vld [vmem:[#allocation2 + $0x3f0] sm:$0xff]
        %v1819 = vld [vmem:[#allocation2 + $0x3f8] sm:$0xff]
        %v1820 = vld [vmem:[#allocation2 + $0x400] sm:$0xff]
        %v1821 = vld [vmem:[#allocation2 + $0x408] sm:$0xff]
        %v1822 = vld [vmem:[#allocation2 + $0x410] sm:$0xff]
        %v1823 = vld [vmem:[#allocation2 + $0x418] sm:$0xff]
        %v1824 = vld [vmem:[#allocation2 + $0x420] sm:$0xff]
        %v1825 = vld [vmem:[#allocation2 + $0x428] sm:$0xff]
        %v1826 = vld [vmem:[#allocation2 + $0x430] sm:$0xff]
        %v1827 = vld [vmem:[#allocation2 + $0x438] sm:$0xff]
        %v1828 = vld [vmem:[#allocation2 + $0x440] sm:$0xff]
        %v1829 = vld [vmem:[#allocation2 + $0x448] sm:$0xff]
        %v1830 = vld [vmem:[#allocation2 + $0x450] sm:$0xff]
        %v1831 = vld [vmem:[#allocation2 + $0x458] sm:$0xff]
        %v1832 = vld [vmem:[#allocation2 + $0x460] sm:$0xff]
        %v1833 = vld [vmem:[#allocation2 + $0x468] sm:$0xff]
        %v1834 = vld [vmem:[#allocation2 + $0x470] sm:$0xff]
        %v1835 = vld [vmem:[#allocation2 + $0x478] sm:$0xff]
        %1837 = vset.pattern.permute.xlu0 0
        %1838 = vperm.xlu0 %1837, %v228
        %v1839 = vpop.permute.xlu0 %1838
        %1842 = vset.pattern.permute.xlu0 0
        %1843 = vperm.xlu0 %1842, %v229
        %v1844 = vpop.permute.xlu0 %1843
        %1847 = vset.pattern.permute.xlu0 0
        %1848 = vperm.xlu0 %1847, %v230
        %v1849 = vpop.permute.xlu0 %1848
        %1852 = vset.pattern.permute.xlu0 0
        %1853 = vperm.xlu0 %1852, %v231
        %v1854 = vpop.permute.xlu0 %1853
        %1857 = vset.pattern.permute.xlu0 0
        %1858 = vperm.xlu0 %1857, %v232
        %v1859 = vpop.permute.xlu0 %1858
        %1862 = vset.pattern.permute.xlu0 0
        %1863 = vperm.xlu0 %1862, %v233
        %v1864 = vpop.permute.xlu0 %1863
        %1867 = vset.pattern.permute.xlu0 0
        %1868 = vperm.xlu0 %1867, %v234
        %v1869 = vpop.permute.xlu0 %1868
        %1872 = vset.pattern.permute.xlu0 0
        %1873 = vperm.xlu0 %1872, %v235
        %v1874 = vpop.permute.xlu0 %1873
        %vm1876 = vcmask 523264
        %v1878 = vsel %vm1876, %v1656, 0
        %v1881 = vsel %vm1876, %v1661, 0
        %v1884 = vsel %vm1876, %v1666, 0
        %v1887 = vsel %vm1876, %v1671, 0
        %v1890 = vsel %vm1876, %v1676, 0
        %v1893 = vsel %vm1876, %v1681, 0
        %v1896 = vsel %vm1876, %v1686, 0
        %v1899 = vsel %vm1876, %v1691, 0
        %1901 = vmatprep.subr.mxu0 %v1693
        %1902 = vmatpush1.msra.mxu0 %v1692
        %1903 = vmatprep.subr.mxu0 %v1695
        %1904 = vmatpush1.msra.mxu0 %v1694
        %1905 = vmatprep.subr.mxu0 %v1697
        %1906 = vmatpush1.msra.mxu0 %v1696
        %1907 = vmatprep.subr.mxu0 %v1699
        %1908 = vmatpush1.msra.mxu0 %v1698
        %1909 = vmatprep.subr.mxu0 %v1701
        %1910 = vmatpush1.msra.mxu0 %v1700
        %1911 = vmatprep.subr.mxu0 %v1703
        %1912 = vmatpush1.msra.mxu0 %v1702
        %1913 = vmatprep.subr.mxu0 %v1705
        %1914 = vmatpush1.msra.mxu0 %v1704
        %1915 = vmatprep.subr.mxu0 %v1707
        %1916 = vmatpush1.msra.mxu0 %v1706
        %1917 = vmatprep.subr.mxu0 %v1709
        %1918 = vmatpush1.msra.mxu0 %v1708
        %1919 = vmatprep.subr.mxu0 %v1711
        %1920 = vmatpush1.msra.mxu0 %v1710
        %1921 = vmatprep.subr.mxu0 %v1713
        %1922 = vmatpush1.msra.mxu0 %v1712
        %1923 = vmatprep.subr.mxu0 %v1715
        %1924 = vmatpush1.msra.mxu0 %v1714
        %1925 = vmatprep.subr.mxu0 %v1717
        %1926 = vmatpush1.msra.mxu0 %v1716
        %1927 = vmatprep.subr.mxu0 %v1719
        %1928 = vmatpush1.msra.mxu0 %v1718
        %1929 = vmatprep.subr.mxu0 %v1721
        %1930 = vmatpush1.msra.mxu0 %v1720
        %1931 = vmatprep.subr.mxu0 %v1723
        %1932 = vmatpush1.msra.mxu0 %v1722
        %1933 = vmatprep.subr.mxu0 %v1725
        %1934 = vmatpush1.msra.mxu0 %v1724
        %1935 = vmatprep.subr.mxu0 %v1727
        %1936 = vmatpush1.msra.mxu0 %v1726
        %1937 = vmatprep.subr.mxu0 %v1729
        %1938 = vmatpush1.msra.mxu0 %v1728
        %1939 = vmatprep.subr.mxu0 %v1731
        %1940 = vmatpush1.msra.mxu0 %v1730
        %1941 = vmatprep.subr.mxu0 %v1733
        %1942 = vmatpush1.msra.mxu0 %v1732
        %1943 = vmatprep.subr.mxu0 %v1735
        %1944 = vmatpush1.msra.mxu0 %v1734
        %1945 = vmatprep.subr.mxu0 %v1737
        %1946 = vmatpush1.msra.mxu0 %v1736
        %1947 = vmatprep.subr.mxu0 %v1739
        %1948 = vmatpush1.msra.mxu0 %v1738
        %1949 = vmatprep.subr.mxu0 %v1741
        %1950 = vmatpush1.msra.mxu0 %v1740
        %1951 = vmatprep.subr.mxu0 %v1743
        %1952 = vmatpush1.msra.mxu0 %v1742
        %1953 = vmatprep.subr.mxu0 %v1745
        %1954 = vmatpush1.msra.mxu0 %v1744
        %1955 = vmatprep.subr.mxu0 %v1747
        %1956 = vmatpush1.msra.mxu0 %v1746
        %1957 = vmatprep.subr.mxu0 %v1749
        %1958 = vmatpush1.msra.mxu0 %v1748
        %1959 = vmatprep.subr.mxu0 %v1751
        %1960 = vmatpush1.msra.mxu0 %v1750
        %1961 = vmatprep.subr.mxu0 %v1753
        %1962 = vmatpush1.msra.mxu0 %v1752
        %1963 = vmatprep.subr.mxu0 %v1755
        %1964 = vmatpush1.msra.mxu0 %v1754
        %1965 = vmatprep.mubr.f32.mxu0 %v1653
        %1966 = vmatmul.mubr.f32.gmra.mrb[0].mxu0 %v1652
        %v1967 = vpop.f32.mrb[0].mxu0
        %v1968 = vadd.f32 %v1839, %v1967
        %v1969 = vpop.f32.mrb[0].mxu0
        %v1970 = vadd.f32 %v1839, %v1969
        %1971 = vmatprep.mubr.f32.mxu0 %v1658
        %1972 = vmatmul.mubr.f32.gmra.mrb[0].mxu0 %v1657
        %v1973 = vpop.f32.mrb[0].mxu0
        %v1974 = vadd.f32 %v1844, %v1973
        %v1975 = vpop.f32.mrb[0].mxu0
        %v1976 = vadd.f32 %v1844, %v1975
        %1977 = vmatprep.mubr.f32.mxu0 %v1663
        %1978 = vmatmul.mubr.f32.gmra.mrb[0].mxu0 %v1662
        %v1979 = vpop.f32.mrb[0].mxu0
        %v1980 = vadd.f32 %v1849, %v1979
        %v1981 = vpop.f32.mrb[0].mxu0
        %v1982 = vadd.f32 %v1849, %v1981
        %1983 = vmatprep.mubr.f32.mxu0 %v1668
        %1984 = vmatmul.mubr.f32.gmra.mrb[0].mxu0 %v1667
        %v1985 = vpop.f32.mrb[0].mxu0
        %v1986 = vadd.f32 %v1854, %v1985
        %v1987 = vpop.f32.mrb[0].mxu0
        %v1988 = vadd.f32 %v1854, %v1987
        %1989 = vmatprep.mubr.f32.mxu0 %v1673
        %1990 = vmatmul.mubr.f32.gmra.mrb[0].mxu0 %v1672
        %v1991 = vpop.f32.mrb[0].mxu0
        %v1992 = vadd.f32 %v1859, %v1991
        %v1993 = vpop.f32.mrb[0].mxu0
        %v1994 = vadd.f32 %v1859, %v1993
        %1995 = vmatprep.mubr.f32.mxu0 %v1678
        %1996 = vmatmul.mubr.f32.gmra.mrb[0].mxu0 %v1677
        %v1997 = vpop.f32.mrb[0].mxu0
        %v1998 = vadd.f32 %v1864, %v1997
        %v1999 = vpop.f32.mrb[0].mxu0
        %v2000 = vadd.f32 %v1864, %v1999
        %2001 = vmatprep.mubr.f32.mxu0 %v1683
        %2002 = vmatmul.mubr.f32.gmra.mrb[0].mxu0 %v1682
        %v2003 = vpop.f32.mrb[0].mxu0
        %v2004 = vadd.f32 %v1869, %v2003
        %v2005 = vpop.f32.mrb[0].mxu0
        %v2006 = vadd.f32 %v1869, %v2005
        %2007 = vmatprep.mubr.f32.mxu0 %v1688
        %2008 = vmatmul.mubr.f32.gmra.mrb[0].mxu0 %v1687
        %v2009 = vpop.f32.mrb[0].mxu0
        %v2010 = vadd.f32 %v1874, %v2009
        %v2011 = vpop.f32.mrb[0].mxu0
        %v2012 = vadd.f32 %v1874, %v2011
        %2013 = vdwg.mxu0
        %2014 = vmatprep.subr.mxu0 %v1757
        %2015 = vmatpush1.msra.mxu0 %v1756
        %2016 = vmatprep.subr.mxu0 %v1759
        %2017 = vmatpush1.msra.mxu0 %v1758
        %2018 = vmatprep.subr.mxu0 %v1761
        %2019 = vmatpush1.msra.mxu0 %v1760
        %2020 = vmatprep.subr.mxu0 %v1763
        %2021 = vmatpush1.msra.mxu0 %v1762
        %2022 = vmatprep.subr.mxu0 %v1765
        %2023 = vmatpush1.msra.mxu0 %v1764
        %2024 = vmatprep.subr.mxu0 %v1767
        %2025 = vmatpush1.msra.mxu0 %v1766
        %2026 = vmatprep.subr.mxu0 %v1769
        %2027 = vmatpush1.msra.mxu0 %v1768
        %2028 = vmatprep.subr.mxu0 %v1771
        %2029 = vmatpush1.msra.mxu0 %v1770
        %2030 = vmatprep.subr.mxu0 %v1773
        %2031 = vmatpush1.msra.mxu0 %v1772
        %2032 = vmatprep.subr.mxu0 %v1775
        %2033 = vmatpush1.msra.mxu0 %v1774
        %2034 = vmatprep.subr.mxu0 %v1777
        %2035 = vmatpush1.msra.mxu0 %v1776
        %2036 = vmatprep.subr.mxu0 %v1779
        %2037 = vmatpush1.msra.mxu0 %v1778
        %2038 = vmatprep.subr.mxu0 %v1781
        %2039 = vmatpush1.msra.mxu0 %v1780
        %2040 = vmatprep.subr.mxu0 %v1783
        %2041 = vmatpush1.msra.mxu0 %v1782
        %2042 = vmatprep.subr.mxu0 %v1785
        %2043 = vmatpush1.msra.mxu0 %v1784
        %2044 = vmatprep.subr.mxu0 %v1787
        %2045 = vmatpush1.msra.mxu0 %v1786
        %2046 = vmatprep.subr.mxu0 %v1789
        %2047 = vmatpush1.msra.mxu0 %v1788
        %2048 = vmatprep.subr.mxu0 %v1791
        %2049 = vmatpush1.msra.mxu0 %v1790
        %2050 = vmatprep.subr.mxu0 %v1793
        %2051 = vmatpush1.msra.mxu0 %v1792
        %2052 = vmatprep.subr.mxu0 %v1795
        %2053 = vmatpush1.msra.mxu0 %v1794
        %2054 = vmatprep.subr.mxu0 %v1797
        %2055 = vmatpush1.msra.mxu0 %v1796
        %2056 = vmatprep.subr.mxu0 %v1799
        %2057 = vmatpush1.msra.mxu0 %v1798
        %2058 = vmatprep.subr.mxu0 %v1801
        %2059 = vmatpush1.msra.mxu0 %v1800
        %2060 = vmatprep.subr.mxu0 %v1803
        %2061 = vmatpush1.msra.mxu0 %v1802
        %2062 = vmatprep.subr.mxu0 %v1805
        %2063 = vmatpush1.msra.mxu0 %v1804
        %2064 = vmatprep.subr.mxu0 %v1807
        %2065 = vmatpush1.msra.mxu0 %v1806
        %2066 = vmatprep.subr.mxu0 %v1809
        %2067 = vmatpush1.msra.mxu0 %v1808
        %2068 = vmatprep.subr.mxu0 %v1811
        %2069 = vmatpush1.msra.mxu0 %v1810
        %2070 = vmatprep.subr.mxu0 %v1813
        %2071 = vmatpush1.msra.mxu0 %v1812
        %2072 = vmatprep.subr.mxu0 %v1815
        %2073 = vmatpush1.msra.mxu0 %v1814
        %2074 = vmatprep.subr.mxu0 %v1817
        %2075 = vmatpush1.msra.mxu0 %v1816
        %2076 = vmatprep.subr.mxu0 %v1819
        %2077 = vmatpush1.msra.mxu0 %v1818
        %2078 = vmatprep.mubr.f32.mxu0 %v1655
        %2079 = vmatmul.mubr.f32.gmra.mrb[0].mxu0 %v1654
        %v2080 = vpop.f32.mrb[0].mxu0
        %v2081 = vadd.f32 %v1968, %v2080
        %v2082 = vpop.f32.mrb[0].mxu0
        %v2083 = vadd.f32 %v1970, %v2082
        %2084 = vmatprep.mubr.f32.mxu0 %v1660
        %2085 = vmatmul.mubr.f32.gmra.mrb[0].mxu0 %v1659
        %v2086 = vpop.f32.mrb[0].mxu0
        %v2087 = vadd.f32 %v1974, %v2086
        %v2088 = vpop.f32.mrb[0].mxu0
        %v2089 = vadd.f32 %v1976, %v2088
        %2090 = vmatprep.mubr.f32.mxu0 %v1665
        %2091 = vmatmul.mubr.f32.gmra.mrb[0].mxu0 %v1664
        %v2092 = vpop.f32.mrb[0].mxu0
        %v2093 = vadd.f32 %v1980, %v2092
        %v2094 = vpop.f32.mrb[0].mxu0
        %v2095 = vadd.f32 %v1982, %v2094
        %2096 = vmatprep.mubr.f32.mxu0 %v1670
        %2097 = vmatmul.mubr.f32.gmra.mrb[0].mxu0 %v1669
        %v2098 = vpop.f32.mrb[0].mxu0
        %v2099 = vadd.f32 %v1986, %v2098
        %v2100 = vpop.f32.mrb[0].mxu0
        %v2101 = vadd.f32 %v1988, %v2100
        %2102 = vmatprep.mubr.f32.mxu0 %v1675
        %2103 = vmatmul.mubr.f32.gmra.mrb[0].mxu0 %v1674
        %v2104 = vpop.f32.mrb[0].mxu0
        %v2105 = vadd.f32 %v1992, %v2104
        %v2106 = vpop.f32.mrb[0].mxu0
        %v2107 = vadd.f32 %v1994, %v2106
        %2108 = vmatprep.mubr.f32.mxu0 %v1680
        %2109 = vmatmul.mubr.f32.gmra.mrb[0].mxu0 %v1679
        %v2110 = vpop.f32.mrb[0].mxu0
        %v2111 = vadd.f32 %v1998, %v2110
        %v2112 = vpop.f32.mrb[0].mxu0
        %v2113 = vadd.f32 %v2000, %v2112
        %2114 = vmatprep.mubr.f32.mxu0 %v1685
        %2115 = vmatmul.mubr.f32.gmra.mrb[0].mxu0 %v1684
        %v2116 = vpop.f32.mrb[0].mxu0
        %v2117 = vadd.f32 %v2004, %v2116
        %v2118 = vpop.f32.mrb[0].mxu0
        %v2119 = vadd.f32 %v2006, %v2118
        %2120 = vmatprep.mubr.f32.mxu0 %v1690
        %2121 = vmatmul.mubr.f32.gmra.mrb[0].mxu0 %v1689
        %v2122 = vpop.f32.mrb[0].mxu0
        %v2123 = vadd.f32 %v2010, %v2122
        %v2124 = vpop.f32.mrb[0].mxu0
        %v2125 = vadd.f32 %v2012, %v2124
        %2126 = vdwg.mxu0
        %2127 = vmatprep.subr.mxu0 %v1821
        %2128 = vmatpush1.msra.mxu0 %v1820
        %2129 = vmatprep.subr.mxu0 %v1823
        %2130 = vmatpush1.msra.mxu0 %v1822
        %2131 = vmatprep.subr.mxu0 %v1825
        %2132 = vmatpush1.msra.mxu0 %v1824
        %2133 = vmatprep.subr.mxu0 %v1827
        %2134 = vmatpush1.msra.mxu0 %v1826
        %2135 = vmatprep.subr.mxu0 %v1829
        %2136 = vmatpush1.msra.mxu0 %v1828
        %2137 = vmatprep.subr.mxu0 %v1831
        %2138 = vmatpush1.msra.mxu0 %v1830
        %2139 = vmatprep.subr.mxu0 %v1833
        %2140 = vmatpush1.msra.mxu0 %v1832
        %2141 = vmatprep.subr.mxu0 %v1835
        %2142 = vmatpush1.msra.mxu0 %v1834
        %2143 = vmatprep.subr.mxu0 0.0
        %2144 = vmatpush1.msra.mxu0 0.0
        %2145 = vmatprep.subr.mxu0 0.0
        %2146 = vmatpush1.msra.mxu0 0.0
        %2147 = vmatprep.subr.mxu0 0.0
        %2148 = vmatpush1.msra.mxu0 0.0
        %2149 = vmatprep.subr.mxu0 0.0
        %2150 = vmatpush1.msra.mxu0 0.0
        %2151 = vmatprep.subr.mxu0 0.0
        %2152 = vmatpush1.msra.mxu0 0.0
        %2153 = vmatprep.subr.mxu0 0.0
        %2154 = vmatpush1.msra.mxu0 0.0
        %2155 = vmatprep.subr.mxu0 0.0
        %2156 = vmatpush1.msra.mxu0 0.0
        %2157 = vmatprep.subr.mxu0 0.0
        %2158 = vmatpush1.msra.mxu0 0.0
        %2159 = vmatprep.subr.mxu0 0.0
        %2160 = vmatpush1.msra.mxu0 0.0
        %2161 = vmatprep.subr.mxu0 0.0
        %2162 = vmatpush1.msra.mxu0 0.0
        %2163 = vmatprep.subr.mxu0 0.0
        %2164 = vmatpush1.msra.mxu0 0.0
        %2165 = vmatprep.subr.mxu0 0.0
        %2166 = vmatpush1.msra.mxu0 0.0
        %2167 = vmatprep.subr.mxu0 0.0
        %2168 = vmatpush1.msra.mxu0 0.0
        %2169 = vmatprep.subr.mxu0 0.0
        %2170 = vmatpush1.msra.mxu0 0.0
        %2171 = vmatprep.subr.mxu0 0.0
        %2172 = vmatpush1.msra.mxu0 0.0
        %2173 = vmatprep.subr.mxu0 0.0
        %2174 = vmatpush1.msra.mxu0 0.0
        %2175 = vmatprep.subr.mxu0 0.0
        %2176 = vmatpush1.msra.mxu0 0.0
        %2177 = vmatprep.subr.mxu0 0.0
        %2178 = vmatpush1.msra.mxu0 0.0
        %2179 = vmatprep.subr.mxu0 0.0
        %2180 = vmatpush1.msra.mxu0 0.0
        %2181 = vmatprep.subr.mxu0 0.0
        %2182 = vmatpush1.msra.mxu0 0.0
        %2183 = vmatprep.subr.mxu0 0.0
        %2184 = vmatpush1.msra.mxu0 0.0
        %2185 = vmatprep.subr.mxu0 0.0
        %2186 = vmatpush1.msra.mxu0 0.0
        %2187 = vmatprep.subr.mxu0 0.0
        %2188 = vmatpush1.msra.mxu0 0.0
        %2189 = vmatprep.subr.mxu0 0.0
        %2190 = vmatpush1.msra.mxu0 0.0
        %2191 = vmatprep.mubr.f32.mxu0 0.0
        %2192 = vmatmul.mubr.f32.gmra.mrb[0].mxu0 %v1878
        %v2193 = vpop.f32.mrb[0].mxu0
        %v2194 = vadd.f32 %v2081, %v2193
        %v2195 = vpop.f32.mrb[0].mxu0
        %v2196 = vadd.f32 %v2083, %v2195
        %2197 = vmatprep.mubr.f32.mxu0 0.0
        %2198 = vmatmul.mubr.f32.gmra.mrb[0].mxu0 %v1881
        %v2199 = vpop.f32.mrb[0].mxu0
        %v2200 = vadd.f32 %v2087, %v2199
        %v2201 = vpop.f32.mrb[0].mxu0
        %v2202 = vadd.f32 %v2089, %v2201
        %2203 = vmatprep.mubr.f32.mxu0 0.0
        %2204 = vmatmul.mubr.f32.gmra.mrb[0].mxu0 %v1884
        %v2205 = vpop.f32.mrb[0].mxu0
        %v2206 = vadd.f32 %v2093, %v2205
        %v2207 = vpop.f32.mrb[0].mxu0
        %v2208 = vadd.f32 %v2095, %v2207
        %2209 = vmatprep.mubr.f32.mxu0 0.0
        %2210 = vmatmul.mubr.f32.gmra.mrb[0].mxu0 %v1887
        %v2211 = vpop.f32.mrb[0].mxu0
        %v2212 = vadd.f32 %v2099, %v2211
        %v2213 = vpop.f32.mrb[0].mxu0
        %v2214 = vadd.f32 %v2101, %v2213
        %2215 = vmatprep.mubr.f32.mxu0 0.0
        %2216 = vmatmul.mubr.f32.gmra.mrb[0].mxu0 %v1890
        %v2217 = vpop.f32.mrb[0].mxu0
        %v2218 = vadd.f32 %v2105, %v2217
        %v2219 = vpop.f32.mrb[0].mxu0
        %v2220 = vadd.f32 %v2107, %v2219
        %2221 = vmatprep.mubr.f32.mxu0 0.0
        %2222 = vmatmul.mubr.f32.gmra.mrb[0].mxu0 %v1893
        %v2223 = vpop.f32.mrb[0].mxu0
        %v2224 = vadd.f32 %v2111, %v2223
        %v2225 = vpop.f32.mrb[0].mxu0
        %v2226 = vadd.f32 %v2113, %v2225
        %2227 = vmatprep.mubr.f32.mxu0 0.0
        %2228 = vmatmul.mubr.f32.gmra.mrb[0].mxu0 %v1896
        %v2229 = vpop.f32.mrb[0].mxu0
        %v2230 = vadd.f32 %v2117, %v2229
        %v2231 = vpop.f32.mrb[0].mxu0
        %v2232 = vadd.f32 %v2119, %v2231
        %2233 = vmatprep.mubr.f32.mxu0 0.0
        %2234 = vmatmul.mubr.f32.gmra.mrb[0].mxu0 %v1899
        %v2235 = vpop.f32.mrb[0].mxu0
        %v2236 = vadd.f32 %v2123, %v2235
        %v2237 = vpop.f32.mrb[0].mxu0
        %v2238 = vadd.f32 %v2125, %v2237
        %2239 = vdwg.mxu0
        %v2240 = vmax.f32 %v2194, 0.0
        %v2241 = vmax.f32 %v2196, 0.0
        %v2242 = vmax.f32 %v2200, 0.0
        %v2243 = vmax.f32 %v2202, 0.0
        %v2244 = vmax.f32 %v2206, 0.0
        %v2245 = vmax.f32 %v2208, 0.0
        %v2246 = vmax.f32 %v2212, 0.0
        %v2247 = vmax.f32 %v2214, 0.0
        %v2248 = vmax.f32 %v2218, 0.0
        %v2249 = vmax.f32 %v2220, 0.0
        %v2250 = vmax.f32 %v2224, 0.0
        %v2251 = vmax.f32 %v2226, 0.0
        %v2252 = vmax.f32 %v2230, 0.0
        %v2253 = vmax.f32 %v2232, 0.0
        %v2254 = vmax.f32 %v2236, 0.0
        %v2255 = vmax.f32 %v2238, 0.0
        %v2256 = vld [vmem:[%s3] sm:$0xff]
        %v2257 = vld [vmem:[%s3 + $0x8] sm:$0xff]
        %2259 = vset.pattern.permute.xlu0 0
        %2260 = vperm.xlu0 %2259, %v236
        %v2261 = vpop.permute.xlu0 %2260
        %2264 = vset.pattern.permute.xlu0 0
        %2265 = vperm.xlu0 %2264, %v237
        %v2266 = vpop.permute.xlu0 %2265
        %v2269 = vsel %vm1876, %v2256, 0
        %v2272 = vsel %vm1876, %v2257, 0
        %2274 = vmatprep.subr.mxu0 %v2241
        %2275 = vmatpush1.msra.mxu0 %v2240
        %2276 = vmatprep.subr.mxu0 %v2243
        %2277 = vmatpush1.msra.mxu0 %v2242
        %2278 = vmatprep.subr.mxu0 %v2245
        %2279 = vmatpush1.msra.mxu0 %v2244
        %2280 = vmatprep.subr.mxu0 %v2247
        %2281 = vmatpush1.msra.mxu0 %v2246
        %2282 = vmatprep.subr.mxu0 %v2249
        %2283 = vmatpush1.msra.mxu0 %v2248
        %2284 = vmatprep.subr.mxu0 %v2251
        %2285 = vmatpush1.msra.mxu0 %v2250
        %2286 = vmatprep.subr.mxu0 %v2253
        %2287 = vmatpush1.msra.mxu0 %v2252
        %2288 = vmatprep.subr.mxu0 %v2255
        %2289 = vmatpush1.msra.mxu0 %v2254
        %2290 = vmatprep.subr.mxu0 0.0
        %2291 = vmatpush1.msra.mxu0 0.0
        %2292 = vmatprep.subr.mxu0 0.0
        %2293 = vmatpush1.msra.mxu0 0.0
        %2294 = vmatprep.subr.mxu0 0.0
        %2295 = vmatpush1.msra.mxu0 0.0
        %2296 = vmatprep.subr.mxu0 0.0
        %2297 = vmatpush1.msra.mxu0 0.0
        %2298 = vmatprep.subr.mxu0 0.0
        %2299 = vmatpush1.msra.mxu0 0.0
        %2300 = vmatprep.subr.mxu0 0.0
        %2301 = vmatpush1.msra.mxu0 0.0
        %2302 = vmatprep.subr.mxu0 0.0
        %2303 = vmatpush1.msra.mxu0 0.0
        %2304 = vmatprep.subr.mxu0 0.0
        %2305 = vmatpush1.msra.mxu0 0.0
        %2306 = vmatprep.subr.mxu0 0.0
        %2307 = vmatpush1.msra.mxu0 0.0
        %2308 = vmatprep.subr.mxu0 0.0
        %2309 = vmatpush1.msra.mxu0 0.0
        %2310 = vmatprep.subr.mxu0 0.0
        %2311 = vmatpush1.msra.mxu0 0.0
        %2312 = vmatprep.subr.mxu0 0.0
        %2313 = vmatpush1.msra.mxu0 0.0
        %2314 = vmatprep.subr.mxu0 0.0
        %2315 = vmatpush1.msra.mxu0 0.0
        %2316 = vmatprep.subr.mxu0 0.0
        %2317 = vmatpush1.msra.mxu0 0.0
        %2318 = vmatprep.subr.mxu0 0.0
        %2319 = vmatpush1.msra.mxu0 0.0
        %2320 = vmatprep.subr.mxu0 0.0
        %2321 = vmatpush1.msra.mxu0 0.0
        %2322 = vmatprep.subr.mxu0 0.0
        %2323 = vmatpush1.msra.mxu0 0.0
        %2324 = vmatprep.subr.mxu0 0.0
        %2325 = vmatpush1.msra.mxu0 0.0
        %2326 = vmatprep.subr.mxu0 0.0
        %2327 = vmatpush1.msra.mxu0 0.0
        %2328 = vmatprep.subr.mxu0 0.0
        %2329 = vmatpush1.msra.mxu0 0.0
        %2330 = vmatprep.subr.mxu0 0.0
        %2331 = vmatpush1.msra.mxu0 0.0
        %2332 = vmatprep.subr.mxu0 0.0
        %2333 = vmatpush1.msra.mxu0 0.0
        %2334 = vmatprep.subr.mxu0 0.0
        %2335 = vmatpush1.msra.mxu0 0.0
        %2336 = vmatprep.subr.mxu0 0.0
        %2337 = vmatpush1.msra.mxu0 0.0
        %2338 = vmatprep.mubr.f32.mxu0 0.0
        %2339 = vmatmul.mubr.f32.gmra.mrb[0].mxu0 %v2269
        %v2340 = vpop.f32.mrb[0].mxu0
        %v2341 = vadd.f32 %v2261, %v2340
        %v2342 = vpop.f32.mrb[0].mxu0
        %v2343 = vadd.f32 %v2261, %v2342
        %2344 = vmatprep.mubr.f32.mxu0 0.0
        %2345 = vmatmul.mubr.f32.gmra.mrb[0].mxu0 %v2272
        %v2346 = vpop.f32.mrb[0].mxu0
        %v2347 = vadd.f32 %v2266, %v2346
        %v2348 = vpop.f32.mrb[0].mxu0
        %v2349 = vadd.f32 %v2266, %v2348
        %2350 = vdwg.mxu0
        %2351 = vst [vmem:[%s213] sm:$0xff] %v2341
        %2352 = vst [vmem:[%s213 + $0x8] sm:$0xff] %v2343
        %2353 = vst [vmem:[%s213 + $0x10] sm:$0xff] %v2347
        %2354 = vst [vmem:[%s213 + $0x18] sm:$0xff] %v2349
        %s2355 = sand.u32 %s134, 1
        %s2356 = sand.u32 %s134, 1
        %s2357 = smul.addr %s2356, 32
        %s2358 = scalar_lea.vmem [#allocation3], %s2357
        // Predicated region
        $region41: #{scr_forward.1} parent=39 // pred_check
          %p2359 = pneg %p144
        $region42: #{scr_forward.1} parent=39 // pred_check_branch
          %2361 = sbr.rel (%p2359) target = $region44
        $region43: #{scr_forward.1} parent=39 // pred_region
          %s2362 = smul.u32 2, %s16
          %s2363 = smul.addr %s2362, 8
          %s2364 = scalar_lea.vmem %s5, %s2363
          // Predicated region
          $region45: #{scr_forward.1} parent=43 // pred_check
            _
          $region46: #{scr_forward.1} parent=43 // pred_check_branch
            %2366 = sbr.rel (0) target = $region48
          $region47: #{scr_forward.1} parent=43 // pred_region
            // Predicated region
            $region49: #{scr_forward.1} parent=47 // pred_check
              _
            $region50: #{scr_forward.1} parent=47 // pred_check_branch
              %2368 = sbr.rel (0) target = $region52
            $region51: #{scr_forward.1} parent=47 // pred_region
              loop: start=0, step=1, limit=1
              $region53: #{scr_forward.1} parent=51 // loop_pre_header
                _
              $region54: #{scr_forward.1} parent=51 // loop_header
                %s2370 = sphi 0, %s2374
                %p2371 = scmp.ge.s32.totalorder %s2370, 1
                %s2375 = sphi %s2358, %s2358
                %s2376 = sphi %s2364, %s2364
              $region55: #{scr_forward.1} parent=51 // loop_header_branch
                %2373 = sbr.rel (%p2371) target = $region59
              $region56: #{scr_forward.1} parent=51 // loop_body
                %v2377 = vld [vmem:[%s2375] sm:$0xff]
                %2378 = vst [vmem:[%s2376] sm:$0xff] %v2377
                %v2379 = vld [vmem:[%s2375 + $0x8] sm:$0xff]
                %2380 = vst [vmem:[%s2376 + $0x8] sm:$0xff] %v2379
                %v2381 = vld [vmem:[%s2375 + $0x10] sm:$0xff]
                %2382 = vst [vmem:[%s2376 + $0x20] sm:$0xff] %v2381
                %v2383 = vld [vmem:[%s2375 + $0x18] sm:$0xff]
                %2384 = vst [vmem:[%s2376 + $0x28] sm:$0xff] %v2383
              $region57: #{scr_forward.1} parent=51 // loop_footer
                %s2374 = sadd.s32 1, %s2370
              $region58: #{scr_forward.1} parent=51 // loop_footer_branch
                %2369 = sbr.rel target = $region54
              $region59: #{scr_forward.1} parent=51 // loop_exit
                _
            $region52: #{scr_forward.1} parent=47 // pred_fallthru
              _
            // Predicated region
            $region60: #{scr_forward.1} parent=47 // pred_check
              _
            $region61: #{scr_forward.1} parent=47 // pred_check_branch
              %2386 = sbr.rel target = $region63
            $region62: #{scr_forward.1} parent=47 // pred_region
              _
            $region63: #{scr_forward.1} parent=47 // pred_fallthru
              _
          $region48: #{scr_forward.1} parent=43 // pred_fallthru
            _
          %2387 = vnop
        $region44: #{scr_forward.1} parent=39 // pred_fallthru
          _
      $region40: #{scr_forward.1} parent=5 // pred_fallthru
        _
      %p2388 = scmp.le.s32.totalorder 2, %s11
      // Predicated region
      $region64: #{scr_forward.1} parent=5 // pred_check
        %p2389 = pneg %p2388
      $region65: #{scr_forward.1} parent=5 // pred_check_branch
        %2391 = sbr.rel (%p2389) target = $region67
      $region66: #{scr_forward.1} parent=5 // pred_region
        %s2392 = ssub.s32 %s11, 2
        // Predicated region
        $region68: #{scr_forward.1} parent=66 // pred_check
          %p2393 = pneg %p150
        $region69: #{scr_forward.1} parent=66 // pred_check_branch
          %2395 = sbr.rel (%p2393) target = $region71
        $region70: #{scr_forward.1} parent=66 // pred_region
          %s2396 = sand.u32 %s135, 1
          %s2397 = sand.u32 %s135, 1
          %s2398 = smul.addr %s2397, 32
          %s2399 = scalar_lea.vmem [#allocation3], %s2398
        $region71: #{scr_forward.1} parent=66 // pred_fallthru
          _
      $region67: #{scr_forward.1} parent=5 // pred_fallthru
        _
    $region6: #{scr_forward.1} parent=1 // loop_footer
      %s15 = sadd.s32 1, %s11
    $region7: #{scr_forward.1} parent=1 // loop_footer_branch
      %10 = sbr.rel target = $region3
    $region8: #{scr_forward.1} parent=1 // loop_exit
      _

</llo_original>
